<compile_context>
chip_gen: v6e
topology: v6e:2x2x1
jax: 0.10.0
libtpu: 0.0.40
codegen_flags: <defaults>
</compile_context>

<pallas_src>
import jax
import jax.numpy as jnp
from jax.experimental import pallas as pl
from jax.experimental.pallas import tpu as pltpu

_PRED_W = 16  # padded lane width of the 2-wide prediction head


def _round_up(x, m):
    return (x + m - 1) // m * m


def _cdcor_kernel(ua_ref, item_ref, rhs_a_ref, bias_a_ref, rhs_b_ref, b1_ref,
                  wt_top_ref, wt_bot_ref, bt_ref, wp_ref, bp_ref,
                  w2_ref, b2_ref, out_ref):
    f32 = jnp.float32
    bf16 = jnp.bfloat16
    tb, L = ua_ref.shape
    H = b1_ref.shape[1]

    ua = ua_ref[...]                                       # (tb, L) bf16

    # Stage 1 — fused ua-LHS matmul: [user_emb | c_emb | causal_top], 4L lanes.
    y = jnp.dot(ua, rhs_a_ref[...], preferred_element_type=f32) + bias_a_ref[...]
    lane = jax.lax.broadcasted_iota(jnp.int32, y.shape, 1)
    y = jnp.where(lane < 2 * L, jnp.maximum(y, 0.0), y)    # ReLU only on first 2L lanes
    user_emb = y[:, :L]                                    # (tb, L)  f32
    c_emb = y[:, L:2 * L]                                  # (tb, L)  f32
    causal_top = y[:, 2 * L:]                              # (tb, 2L) f32

    # Stage 2 — fused c_emb-LHS matmul: [adj_bottom | w_cls1 | 0-pad].
    z = jnp.dot(c_emb.astype(bf16), rhs_b_ref[...], preferred_element_type=f32)
    causal = causal_top + z[:, :2 * L]                     # (tb, 2L)
    pref = causal[:, L:]                                   # (tb, L)
    h = jax.nn.sigmoid(z[:, 2 * L:2 * L + H] + b1_ref[...])  # (tb, H)

    # Stage 3 — trans (K-split, weights pre-split in wrapper) + classifier head.
    user = (jnp.dot(user_emb.astype(bf16), wt_top_ref[...], preferred_element_type=f32)
            + jnp.dot(pref.astype(bf16), wt_bot_ref[...], preferred_element_type=f32)
            + bt_ref[...])                                 # (tb, L)
    cls = (jnp.dot(h.astype(bf16), w2_ref[...], preferred_element_type=f32)
           + b2_ref[...])                                  # (tb, CW)

    # Stage 4 — prediction head on user * item (elementwise kept in f32).
    pred = (jnp.dot((user * item_ref[...].astype(f32)).astype(bf16), wp_ref[...],
                    preferred_element_type=f32) + bp_ref[...])   # (tb, PRED_W)

    # Widths sum exactly to the slab width: one full lane-dense store.
    out_ref[...] = jnp.concatenate([causal, c_emb, pred, cls], axis=1)


def prepare_params(params):
    """One-time weight prep (domain stacking, fusion, padding, bf16 cast).

    Everything adj-dependent stays per-call in cdcor_forward.
    """
    L = params["w_s_user"].shape[0]
    assert L % 8 == 0 and L % 2 == 0, "latent_dim must be even and a multiple of 8"
    out_w = _round_up(3 * L + _PRED_W + 2, 128)
    CW = out_w - 3 * L - _PRED_W          # classifier head padded width (fills the slab)
    bf16, f32 = jnp.bfloat16, jnp.float32

    def padw(w, width):
        return jnp.pad(w, ((0, 0), (0, width - w.shape[1])))

    return {
        # embedding tables (gathers stay per-call)
        "s_user2latent": params["s_user2latent"].astype(f32),
        "t_user2latent": params["t_user2latent"].astype(f32),
        "embed_s_item": params["embed_s_item"].astype(bf16),
        "embed_t_item": params["embed_t_item"].astype(bf16),
        "adj_matrix": params["adj_matrix"].astype(f32),
        # fused user + c-user embedding weights, per domain
        "wuc": jnp.stack([
            jnp.concatenate([params["w_s_user"], params["w_c_user"]], axis=1),
            jnp.concatenate([params["w_t_user"], params["w_c_user"]], axis=1),
        ]).astype(bf16),                                                  # (2, L, 2L)
        "bias_a": jnp.stack([
            padw(jnp.concatenate([params["b_s_user"], params["b_c_user"]], axis=1), 4 * L),
            padw(jnp.concatenate([params["b_t_user"], params["b_c_user"]], axis=1), 4 * L),
        ]).astype(f32),                                                   # (2, 1, 4L)
        # pre-split trans weights
        "wt_top": jnp.stack([params["w_s_trans"][:L], params["w_t_trans"][:L]]).astype(bf16),
        "wt_bot": jnp.stack([params["w_s_trans"][L:], params["w_t_trans"][L:]]).astype(bf16),
        "bt": jnp.stack([params["b_s_trans"], params["b_t_trans"]]).astype(f32),
        # prediction heads, padded 2 -> _PRED_W lanes
        "wp": jnp.stack([padw(params["w_s_pred"], _PRED_W),
                         padw(params["w_t_pred"], _PRED_W)]).astype(bf16),
        "bp": jnp.stack([padw(params["b_s_pred"], _PRED_W),
                         padw(params["b_t_pred"], _PRED_W)]).astype(f32),
        # classifier
        "w_cls1": params["w_cls1"].astype(bf16),                          # (L, L//2)
        "b_cls1": params["b_cls1"].astype(f32),                           # (1, L//2)
        "w_cls2": padw(params["w_cls2"], CW).astype(bf16),                # (L//2, CW)
        "b_cls2": padw(params["b_cls2"], CW).astype(f32),                 # (1, CW)
    }


def cdcor_forward(prep, s_u, t_u, s_i, t_i):
    bf16 = jnp.bfloat16
    L = prep["wuc"].shape[1]
    H = prep["w_cls1"].shape[1]
    CW = prep["w_cls2"].shape[1]
    out_w = 3 * L + _PRED_W + CW
    WB = _round_up(2 * L + H, 128)

    # threshold(): zero adj entries with -1e-4 < a < 1e-4 (thresholded adj is
    # itself a returned output, so it is produced here and reused as input).
    adj = prep["adj_matrix"]
    adj = jnp.where((adj > -1e-4) & (adj < 1e-4), 0.0, adj)
    adj_b = adj.astype(bf16)
    adj_top, adj_bot = adj_b[:L], adj_b[L:]

    # Per-call fused RHS blocks (adj-dependent).
    rhs_a = jnp.concatenate(
        [prep["wuc"], jnp.broadcast_to(adj_top[None], (2, L, 2 * L))], axis=2)  # (2, L, 4L)
    rhs_b = jnp.concatenate(
        [adj_bot, prep["w_cls1"], jnp.zeros((L, WB - 2 * L - H), bf16)], axis=1)  # (L, WB)

    # Embedding lookups (gathers) — glue in plain JAX.
    s_user_attr = jnp.take(prep["s_user2latent"], s_u, axis=0)   # f32 (also an output)
    t_user_attr = jnp.take(prep["t_user2latent"], t_u, axis=0)
    s_item = jnp.take(prep["embed_s_item"], s_i, axis=0)         # bf16
    t_item = jnp.take(prep["embed_t_item"], t_i, axis=0)

    B = s_user_attr.shape[0]
    Bp = _round_up(B, 16)                 # bf16 sublane packing -> multiple of 16
    tb = Bp if Bp <= 512 else 512         # VMEM-budget driven batch tile
    Bp = _round_up(Bp, tb)
    nbt = Bp // tb

    def pad_b(x):
        return x if x.shape[0] == Bp else jnp.pad(x, ((0, Bp - x.shape[0]), (0, 0)))

    # Stack the two domains along a leading axis (selected by grid axis 0).
    ua = jnp.stack([pad_b(s_user_attr), pad_b(t_user_attr)]).astype(bf16)   # (2, Bp, L)
    item = jnp.stack([pad_b(s_item), pad_b(t_item)])                        # (2, Bp, L) bf16

    in_specs = [
        pl.BlockSpec((None, tb, L), lambda d, b: (d, b, 0)),          # ua
        pl.BlockSpec((None, tb, L), lambda d, b: (d, b, 0)),          # item
        pl.BlockSpec((None, L, 4 * L), lambda d, b: (d, 0, 0)),       # rhs_a (per domain)
        pl.BlockSpec((None, 1, 4 * L), lambda d, b: (d, 0, 0)),       # bias_a
        pl.BlockSpec((L, WB), lambda d, b: (0, 0)),                   # rhs_b (shared)
        pl.BlockSpec((1, H), lambda d, b: (0, 0)),                    # b_cls1 (shared)
        pl.BlockSpec((None, L, L), lambda d, b: (d, 0, 0)),           # wt_top
        pl.BlockSpec((None, L, L), lambda d, b: (d, 0, 0)),           # wt_bot
        pl.BlockSpec((None, 1, L), lambda d, b: (d, 0, 0)),           # bt
        pl.BlockSpec((None, L, _PRED_W), lambda d, b: (d, 0, 0)),     # wp
        pl.BlockSpec((None, 1, _PRED_W), lambda d, b: (d, 0, 0)),     # bp
        pl.BlockSpec((H, CW), lambda d, b: (0, 0)),                   # w_cls2 (shared)
        pl.BlockSpec((1, CW), lambda d, b: (0, 0)),                   # b_cls2 (shared)
    ]
    out_spec = pl.BlockSpec((None, tb, out_w), lambda d, b: (d, b, 0))

    flops = int(2 * 2 * Bp * (L * 4 * L + L * WB + 2 * L * L + L * _PRED_W + H * CW))
    transcendentals = int(2 * Bp * H)
    bytes_accessed = int(2 * Bp * L * 2 * 2            # ua + item (bf16)
                         + 2 * Bp * out_w * 4          # output slab (f32)
                         + 2 * (2 * L * 4 * L + L * WB + 2 * L * L + L * _PRED_W + H * CW))

    out = pl.pallas_call(
        _cdcor_kernel,
        out_shape=jax.ShapeDtypeStruct((2, Bp, out_w), jnp.float32),
        grid=(2, nbt),
        in_specs=in_specs,
        out_specs=out_spec,
        compiler_params=pltpu.CompilerParams(
            dimension_semantics=("parallel", "parallel")),
        cost_estimate=pl.CostEstimate(flops=flops,
                                      transcendentals=transcendentals,
                                      bytes_accessed=bytes_accessed),
    )(ua, item, rhs_a, prep["bias_a"], rhs_b, prep["b_cls1"],
      prep["wt_top"], prep["wt_bot"], prep["bt"], prep["wp"], prep["bp"],
      prep["w_cls2"], prep["b_cls2"])

    # Unpack the lane-dense slab.
    out = out[:, :B, :]
    causal = out[:, :, :2 * L]                                  # (2, B, 2L)
    c_emb = out[:, :, 2 * L:3 * L]                              # (2, B, L)
    pred = out[:, :, 3 * L:3 * L + 2]                           # (2, B, 2)
    cls = out[:, :, 3 * L + _PRED_W:3 * L + _PRED_W + 2]        # (2, B, 2)

    # input = cat(user_attr, c_emb): first half is a verbatim input copy.
    s_input = jnp.concatenate([s_user_attr, c_emb[0]], axis=1)
    t_input = jnp.concatenate([t_user_attr, c_emb[1]], axis=1)

    return (pred[0], pred[1], cls[0], cls[1],
            s_input, t_input, causal[0], causal[1], adj)


def cdcor_reference(params, s_u, t_u, s_i, t_i):
    """Pure-JAX f32 reference of the PyTorch forward (correctness check)."""
    adj = params["adj_matrix"]
    adj = jnp.where((adj > -1e-4) & (adj < 1e-4), 0.0, adj)

    def domain(user_attr, item_emb, wu, bu, wt, bt, wp, bp):
        user_emb = jax.nn.relu(user_attr @ wu + bu)
        c_emb = jax.nn.relu(user_attr @ params["w_c_user"] + params["b_c_user"])
        inp = jnp.concatenate([user_attr, c_emb], axis=1)
        causal = inp @ adj
        pref = causal[:, -user_attr.shape[1]:]
        user = jnp.concatenate([user_emb, pref], axis=1) @ wt + bt
        pred = (user * item_emb) @ wp + bp
        h = jax.nn.sigmoid(c_emb @ params["w_cls1"] + params["b_cls1"])
        cls = h @ params["w_cls2"] + params["b_cls2"]
        return pred, cls, inp, causal

    s_ua = jnp.take(params["s_user2latent"], s_u, axis=0)
    t_ua = jnp.take(params["t_user2latent"], t_u, axis=0)
    s_ie = jnp.take(params["embed_s_item"], s_i, axis=0)
    t_ie = jnp.take(params["embed_t_item"], t_i, axis=0)

    s_pred, s_cls, s_inp, s_causal = domain(
        s_ua, s_ie, params["w_s_user"], params["b_s_user"],
        params["w_s_trans"], params["b_s_trans"],
        params["w_s_pred"], params["b_s_pred"])
    t_pred, t_cls, t_inp, t_causal = domain(
        t_ua, t_ie, params["w_t_user"], params["b_t_user"],
        params["w_t_trans"], params["b_t_trans"],
        params["w_t_pred"], params["b_t_pred"])
    return (s_pred, t_pred, s_cls, t_cls, s_inp, t_inp, s_causal, t_causal, adj)


def init_params(key, input_dim_user, input_dim_s_item, input_dim_t_item,
                latent_dim):
    L = latent_dim
    keys = jax.random.split(key, 24)
    k = iter(keys)

    def lin(kk, fan_in, fan_out):
        # stored as (in, out) -- pre-transposed relative to torch's (out, in)
        bound = 1.0 / jnp.sqrt(fan_in)
        return jax.random.uniform(kk, (fan_in, fan_out), jnp.float32, -bound, bound)

    def bias(kk, fan_in, fan_out):
        bound = 1.0 / jnp.sqrt(fan_in)
        return jax.random.uniform(kk, (1, fan_out), jnp.float32, -bound, bound)

    return {
        "s_user2latent": jax.random.normal(next(k), (input_dim_user, L), jnp.float32),
        "t_user2latent": jax.random.normal(next(k), (input_dim_user, L), jnp.float32),
        "embed_s_item": jax.random.normal(next(k), (input_dim_s_item, L), jnp.float32),
        "embed_t_item": jax.random.normal(next(k), (input_dim_t_item, L), jnp.float32),
        "w_s_user": lin(next(k), L, L), "b_s_user": bias(next(k), L, L),
        "w_t_user": lin(next(k), L, L), "b_t_user": bias(next(k), L, L),
        "w_c_user": lin(next(k), L, L), "b_c_user": bias(next(k), L, L),
        "adj_matrix": 0.15 * jax.random.normal(next(k), (2 * L, 2 * L), jnp.float32),
        "w_s_trans": lin(next(k), 2 * L, L), "b_s_trans": bias(next(k), 2 * L, L),
        "w_t_trans": lin(next(k), 2 * L, L), "b_t_trans": bias(next(k), 2 * L, L),
        "w_s_pred": lin(next(k), L, 2), "b_s_pred": bias(next(k), L, 2),
        "w_t_pred": lin(next(k), L, 2), "b_t_pred": bias(next(k), L, 2),
        "w_cls1": lin(next(k), L, L // 2), "b_cls1": bias(next(k), L, L // 2),
        "w_cls2": lin(next(k), L // 2, 2), "b_cls2": bias(next(k), L // 2, 2),
    }


if __name__ == "__main__":
    B = 8
    LATENT = 32
    N_USER, N_S_ITEM, N_T_ITEM = 50, 40, 45

    key = jax.random.PRNGKey(0)
    kp, ku1, ku2, ki1, ki2, kb = jax.random.split(key, 6)
    params = init_params(kp, N_USER, N_S_ITEM, N_T_ITEM, LATENT)
    prep = prepare_params(params)        # one-time weight prep (hoisted)

    s_u = jax.random.randint(ku1, (B,), 0, N_USER, dtype=jnp.int32)
    t_u = jax.random.randint(ku2, (B,), 0, N_USER, dtype=jnp.int32)
    s_i = jax.random.randint(ki1, (B,), 0, N_S_ITEM, dtype=jnp.int32)
    t_i = jax.random.randint(ki2, (B,), 0, N_T_ITEM, dtype=jnp.int32)

    fwd = jax.jit(cdcor_forward)
    ref_fn = jax.jit(cdcor_reference)

    outs = jax.block_until_ready(fwd(prep, s_u, t_u, s_i, t_i))

    # shape checks (matches the torch forward's return tuple)
    assert outs[0].shape == (B, 2) and outs[1].shape == (B, 2)
    assert outs[2].shape == (B, 2) and outs[3].shape == (B, 2)
    assert outs[4].shape == (B, 2 * LATENT) and outs[5].shape == (B, 2 * LATENT)
    assert outs[6].shape == (B, 2 * LATENT) and outs[7].shape == (B, 2 * LATENT)
    assert outs[8].shape == (2 * LATENT, 2 * LATENT)

    # numerical check vs the pure f32 reference (bf16 MXU path, loose tol)
    refs = jax.block_until_ready(ref_fn(params, s_u, t_u, s_i, t_i))
    for o, r in zip(outs, refs):
        assert jnp.allclose(o, r, atol=5e-2, rtol=5e-2), "mismatch vs reference"

    # second run with a larger batch to exercise batch padding + multi-tile grid
    B2 = 600
    ks = jax.random.split(kb, 4)
    s_u2 = jax.random.randint(ks[0], (B2,), 0, N_USER, dtype=jnp.int32)
    t_u2 = jax.random.randint(ks[1], (B2,), 0, N_USER, dtype=jnp.int32)
    s_i2 = jax.random.randint(ks[2], (B2,), 0, N_S_ITEM, dtype=jnp.int32)
    t_i2 = jax.random.randint(ks[3], (B2,), 0, N_T_ITEM, dtype=jnp.int32)
    outs2 = jax.block_until_ready(fwd(prep, s_u2, t_u2, s_i2, t_i2))
    refs2 = jax.block_until_ready(ref_fn(params, s_u2, t_u2, s_i2, t_i2))
    assert outs2[0].shape == (B2, 2) and outs2[6].shape == (B2, 2 * LATENT)
    for o, r in zip(outs2, refs2):
        assert jnp.allclose(o, r, atol=1e-1, rtol=1e-1), "mismatch vs reference (big batch)"

    print("KERNEL_OK")
</pallas_src>

<mosaic_0001>
module attributes {stable_mosaic.version = 11 : i64} {
  func.func @_cdcor_kernel(%arg0: i32, %arg1: i32, %arg2: memref<1x16x32xbf16, #tpu.memory_space<vmem>>, %arg3: memref<1x16x32xbf16, #tpu.memory_space<vmem>>, %arg4: memref<1x32x128xbf16, #tpu.memory_space<vmem>>, %arg5: memref<1x1x128xf32, #tpu.memory_space<vmem>>, %arg6: memref<32x128xbf16, #tpu.memory_space<vmem>>, %arg7: memref<1x16xf32, #tpu.memory_space<vmem>>, %arg8: memref<1x32x32xbf16, #tpu.memory_space<vmem>>, %arg9: memref<1x32x32xbf16, #tpu.memory_space<vmem>>, %arg10: memref<1x1x32xf32, #tpu.memory_space<vmem>>, %arg11: memref<1x32x16xbf16, #tpu.memory_space<vmem>>, %arg12: memref<1x1x16xf32, #tpu.memory_space<vmem>>, %arg13: memref<16x16xbf16, #tpu.memory_space<vmem>>, %arg14: memref<1x16xf32, #tpu.memory_space<vmem>>, %arg15: memref<1x16x128xf32, #tpu.memory_space<vmem>>) attributes {dimension_semantics = [#tpu.dimension_semantics<parallel>, #tpu.dimension_semantics<parallel>], iteration_bounds = array<i64: 2, 1>, scalar_prefetch = 0 : i64, scratch_operands = 0 : i64, tpu.core_type = #tpu.core_type<tc>, window_params = [{transform_indices = @transform_0, window_bounds = array<i64: 1, 16, 32>}, {transform_indices = @transform_1, window_bounds = array<i64: 1, 16, 32>}, {transform_indices = @transform_2, window_bounds = array<i64: 1, 32, 128>}, {transform_indices = @transform_3, window_bounds = array<i64: 1, 1, 128>}, {pipeline_mode = #tpu.pipeline_mode<synchronous>, transform_indices = @transform_4, window_bounds = array<i64: 32, 128>}, {pipeline_mode = #tpu.pipeline_mode<synchronous>, transform_indices = @transform_5, window_bounds = array<i64: 1, 16>}, {transform_indices = @transform_6, window_bounds = array<i64: 1, 32, 32>}, {transform_indices = @transform_7, window_bounds = array<i64: 1, 32, 32>}, {transform_indices = @transform_8, window_bounds = array<i64: 1, 1, 32>}, {transform_indices = @transform_9, window_bounds = array<i64: 1, 32, 16>}, {transform_indices = @transform_10, window_bounds = array<i64: 1, 1, 16>}, {pipeline_mode = #tpu.pipeline_mode<synchronous>, transform_indices = @transform_11, window_bounds = array<i64: 16, 16>}, {pipeline_mode = #tpu.pipeline_mode<synchronous>, transform_indices = @transform_12, window_bounds = array<i64: 1, 16>}, {transform_indices = @transform_13, window_bounds = array<i64: 1, 16, 128>}]} {
    %c0 = arith.constant 0 : index
    %c0_0 = arith.constant 0 : index
    %c0_1 = arith.constant 0 : index
    %0 = vector.load %arg2[%c0, %c0_0, %c0_1] : memref<1x16x32xbf16, #tpu.memory_space<vmem>>, vector<1x16x32xbf16>
    %1 = vector.shape_cast %0 : vector<1x16x32xbf16> to vector<16x32xbf16>
    %c0_2 = arith.constant 0 : index
    %c0_3 = arith.constant 0 : index
    %c0_4 = arith.constant 0 : index
    %2 = vector.load %arg4[%c0_2, %c0_3, %c0_4] : memref<1x32x128xbf16, #tpu.memory_space<vmem>>, vector<1x32x128xbf16>
    %3 = vector.shape_cast %2 : vector<1x32x128xbf16> to vector<32x128xbf16>
    %cst = arith.constant dense<0.000000e+00> : vector<16x128xf32>
    %4 = tpu.matmul %1, %3, %cst {dimension_numbers = #tpu.dot_dimension_numbers<[1], [0], [0], [1], [0, 0, 1, 1], [], []>} : vector<16x32xbf16>, vector<32x128xbf16>, vector<16x128xf32> -> vector<16x128xf32>
    %c0_5 = arith.constant 0 : index
    %c0_6 = arith.constant 0 : index
    %c0_7 = arith.constant 0 : index
    %5 = vector.load %arg5[%c0_5, %c0_6, %c0_7] : memref<1x1x128xf32, #tpu.memory_space<vmem>>, vector<1x1x128xf32>
    %6 = vector.shape_cast %5 : vector<1x1x128xf32> to vector<1x128xf32>
    %7 = vector.broadcast %6 : vector<1x128xf32> to vector<16x128xf32>
    %8 = arith.addf %4, %7 : vector<16x128xf32>
    %9 = tpu.iota {dimensions = array<i32: 1>} : vector<16x128xi32>
    %c64_i32 = arith.constant 64 : i32
    %10 = vector.broadcast %c64_i32 : i32 to vector<16x128xi32>
    %11 = arith.cmpi slt, %9, %10 : vector<16x128xi32>
    %cst_8 = arith.constant 0.000000e+00 : f32
    %12 = vector.broadcast %cst_8 : f32 to vector<16x128xf32>
    %13 = arith.maximumf %8, %12 : vector<16x128xf32>
    %14 = arith.select %11, %13, %8 : vector<16x128xi1>, vector<16x128xf32>
    %15 = vector.extract_strided_slice %14 {offsets = [0, 0], sizes = [16, 32], strides = [1, 1]} : vector<16x128xf32> to vector<16x32xf32>
    %16 = vector.extract_strided_slice %14 {offsets = [0, 32], sizes = [16, 32], strides = [1, 1]} : vector<16x128xf32> to vector<16x32xf32>
    %17 = vector.extract_strided_slice %14 {offsets = [0, 64], sizes = [16, 64], strides = [1, 1]} : vector<16x128xf32> to vector<16x64xf32>
    %18 = arith.truncf %16 : vector<16x32xf32> to vector<16x32xbf16>
    %c0_9 = arith.constant 0 : index
    %c0_10 = arith.constant 0 : index
    %19 = vector.load %arg6[%c0_9, %c0_10] : memref<32x128xbf16, #tpu.memory_space<vmem>>, vector<32x128xbf16>
    %cst_11 = arith.constant dense<0.000000e+00> : vector<16x128xf32>
    %20 = tpu.matmul %18, %19, %cst_11 {dimension_numbers = #tpu.dot_dimension_numbers<[1], [0], [0], [1], [0, 0, 1, 1], [], []>} : vector<16x32xbf16>, vector<32x128xbf16>, vector<16x128xf32> -> vector<16x128xf32>
    %21 = vector.extract_strided_slice %20 {offsets = [0, 0], sizes = [16, 64], strides = [1, 1]} : vector<16x128xf32> to vector<16x64xf32>
    %22 = arith.addf %17, %21 : vector<16x64xf32>
    %23 = vector.extract_strided_slice %22 {offsets = [0, 32], sizes = [16, 32], strides = [1, 1]} : vector<16x64xf32> to vector<16x32xf32>
    %24 = vector.extract_strided_slice %20 {offsets = [0, 64], sizes = [16, 16], strides = [1, 1]} : vector<16x128xf32> to vector<16x16xf32>
    %c0_12 = arith.constant 0 : index
    %c0_13 = arith.constant 0 : index
    %25 = vector.load %arg7[%c0_12, %c0_13] : memref<1x16xf32, #tpu.memory_space<vmem>>, vector<1x16xf32>
    %26 = vector.broadcast %25 : vector<1x16xf32> to vector<16x16xf32>
    %27 = arith.addf %24, %26 : vector<16x16xf32>
    %28 = arith.negf %27 : vector<16x16xf32>
    %29 = math.exp %28 : vector<16x16xf32>
    %cst_14 = arith.constant 1.000000e+00 : f32
    %30 = vector.broadcast %cst_14 : f32 to vector<16x16xf32>
    %31 = arith.addf %30, %29 : vector<16x16xf32>
    %32 = arith.divf %30, %31 : vector<16x16xf32>
    %33 = arith.truncf %15 : vector<16x32xf32> to vector<16x32xbf16>
    %c0_15 = arith.constant 0 : index
    %c0_16 = arith.constant 0 : index
    %c0_17 = arith.constant 0 : index
    %34 = vector.load %arg8[%c0_15, %c0_16, %c0_17] : memref<1x32x32xbf16, #tpu.memory_space<vmem>>, vector<1x32x32xbf16>
    %35 = vector.shape_cast %34 : vector<1x32x32xbf16> to vector<32x32xbf16>
    %cst_18 = arith.constant dense<0.000000e+00> : vector<16x32xf32>
    %36 = tpu.matmul %33, %35, %cst_18 {dimension_numbers = #tpu.dot_dimension_numbers<[1], [0], [0], [1], [0, 0, 1, 1], [], []>} : vector<16x32xbf16>, vector<32x32xbf16>, vector<16x32xf32> -> vector<16x32xf32>
    %37 = arith.truncf %23 : vector<16x32xf32> to vector<16x32xbf16>
    %c0_19 = arith.constant 0 : index
    %c0_20 = arith.constant 0 : index
    %c0_21 = arith.constant 0 : index
    %38 = vector.load %arg9[%c0_19, %c0_20, %c0_21] : memref<1x32x32xbf16, #tpu.memory_space<vmem>>, vector<1x32x32xbf16>
    %39 = vector.shape_cast %38 : vector<1x32x32xbf16> to vector<32x32xbf16>
    %cst_22 = arith.constant dense<0.000000e+00> : vector<16x32xf32>
    %40 = tpu.matmul %37, %39, %cst_22 {dimension_numbers = #tpu.dot_dimension_numbers<[1], [0], [0], [1], [0, 0, 1, 1], [], []>} : vector<16x32xbf16>, vector<32x32xbf16>, vector<16x32xf32> -> vector<16x32xf32>
    %41 = arith.addf %36, %40 : vector<16x32xf32>
    %c0_23 = arith.constant 0 : index
    %c0_24 = arith.constant 0 : index
    %c0_25 = arith.constant 0 : index
    %42 = vector.load %arg10[%c0_23, %c0_24, %c0_25] : memref<1x1x32xf32, #tpu.memory_space<vmem>>, vector<1x1x32xf32>
    %43 = vector.shape_cast %42 : vector<1x1x32xf32> to vector<1x32xf32>
    %44 = vector.broadcast %43 : vector<1x32xf32> to vector<16x32xf32>
    %45 = arith.addf %41, %44 : vector<16x32xf32>
    %46 = arith.truncf %32 : vector<16x16xf32> to vector<16x16xbf16>
    %c0_26 = arith.constant 0 : index
    %c0_27 = arith.constant 0 : index
    %47 = vector.load %arg13[%c0_26, %c0_27] : memref<16x16xbf16, #tpu.memory_space<vmem>>, vector<16x16xbf16>
    %cst_28 = arith.constant dense<0.000000e+00> : vector<16x16xf32>
    %48 = tpu.matmul %46, %47, %cst_28 {dimension_numbers = #tpu.dot_dimension_numbers<[1], [0], [0], [1], [0, 0, 1, 1], [], []>} : vector<16x16xbf16>, vector<16x16xbf16>, vector<16x16xf32> -> vector<16x16xf32>
    %c0_29 = arith.constant 0 : index
    %c0_30 = arith.constant 0 : index
    %49 = vector.load %arg14[%c0_29, %c0_30] : memref<1x16xf32, #tpu.memory_space<vmem>>, vector<1x16xf32>
    %50 = vector.broadcast %49 : vector<1x16xf32> to vector<16x16xf32>
    %51 = arith.addf %48, %50 : vector<16x16xf32>
    %c0_31 = arith.constant 0 : index
    %c0_32 = arith.constant 0 : index
    %c0_33 = arith.constant 0 : index
    %52 = vector.load %arg3[%c0_31, %c0_32, %c0_33] : memref<1x16x32xbf16, #tpu.memory_space<vmem>>, vector<1x16x32xbf16>
    %53 = vector.shape_cast %52 : vector<1x16x32xbf16> to vector<16x32xbf16>
    %54 = arith.extf %53 : vector<16x32xbf16> to vector<16x32xf32>
    %55 = arith.mulf %45, %54 : vector<16x32xf32>
    %56 = arith.truncf %55 : vector<16x32xf32> to vector<16x32xbf16>
    %c0_34 = arith.constant 0 : index
    %c0_35 = arith.constant 0 : index
    %c0_36 = arith.constant 0 : index
    %57 = vector.load %arg11[%c0_34, %c0_35, %c0_36] : memref<1x32x16xbf16, #tpu.memory_space<vmem>>, vector<1x32x16xbf16>
    %58 = vector.shape_cast %57 : vector<1x32x16xbf16> to vector<32x16xbf16>
    %cst_37 = arith.constant dense<0.000000e+00> : vector<16x16xf32>
    %59 = tpu.matmul %56, %58, %cst_37 {dimension_numbers = #tpu.dot_dimension_numbers<[1], [0], [0], [1], [0, 0, 1, 1], [], []>} : vector<16x32xbf16>, vector<32x16xbf16>, vector<16x16xf32> -> vector<16x16xf32>
    %c0_38 = arith.constant 0 : index
    %c0_39 = arith.constant 0 : index
    %c0_40 = arith.constant 0 : index
    %60 = vector.load %arg12[%c0_38, %c0_39, %c0_40] : memref<1x1x16xf32, #tpu.memory_space<vmem>>, vector<1x1x16xf32>
    %61 = vector.shape_cast %60 : vector<1x1x16xf32> to vector<1x16xf32>
    %62 = vector.broadcast %61 : vector<1x16xf32> to vector<16x16xf32>
    %63 = arith.addf %59, %62 : vector<16x16xf32>
    %64 = tpu.concatenate %22, %16, %63, %51 in 1 : vector<16x64xf32>, vector<16x32xf32>, vector<16x16xf32>, vector<16x16xf32> -> vector<16x128xf32>
    %c0_41 = arith.constant 0 : index
    %c0_42 = arith.constant 0 : index
    %c0_43 = arith.constant 0 : index
    %65 = vector.load %arg15[%c0_41, %c0_42, %c0_43] : memref<1x16x128xf32, #tpu.memory_space<vmem>>, vector<1x16x128xf32>
    %66 = vector.shape_cast %65 : vector<1x16x128xf32> to vector<16x128xf32>
    %67 = vector.shape_cast %64 : vector<16x128xf32> to vector<1x16x128xf32>
    tpu.vector_store %arg15[%c0_41, %c0_42, %c0_43], %67 {strides = array<i32>} : memref<1x16x128xf32, #tpu.memory_space<vmem>>, vector<1x16x128xf32>,
    return
  }
  func.func @transform_0(%arg0: i32, %arg1: i32) -> (i32, i32, i32) {
    %c0_i32 = arith.constant 0 : i32
    %c0_i32_0 = arith.constant 0 : i32
    return %arg0, %arg1, %c0_i32 : i32, i32, i32
  }
  func.func @transform_1(%arg0: i32, %arg1: i32) -> (i32, i32, i32) {
    %c0_i32 = arith.constant 0 : i32
    %c0_i32_0 = arith.constant 0 : i32
    return %arg0, %arg1, %c0_i32 : i32, i32, i32
  }
  func.func @transform_2(%arg0: i32, %arg1: i32) -> (i32, i32, i32) {
    %c0_i32 = arith.constant 0 : i32
    %c0_i32_0 = arith.constant 0 : i32
    %c0_i32_1 = arith.constant 0 : i32
    return %arg0, %c0_i32, %c0_i32_0 : i32, i32, i32
  }
  func.func @transform_3(%arg0: i32, %arg1: i32) -> (i32, i32, i32) {
    %c0_i32 = arith.constant 0 : i32
    %c0_i32_0 = arith.constant 0 : i32
    %c0_i32_1 = arith.constant 0 : i32
    return %arg0, %c0_i32, %c0_i32_0 : i32, i32, i32
  }
  func.func @transform_4(%arg0: i32, %arg1: i32) -> (i32, i32) {
    %c0_i32 = arith.constant 0 : i32
    %c0_i32_0 = arith.constant 0 : i32
    %c0_i32_1 = arith.constant 0 : i32
    return %c0_i32, %c0_i32_0 : i32, i32
  }
  func.func @transform_5(%arg0: i32, %arg1: i32) -> (i32, i32) {
    %c0_i32 = arith.constant 0 : i32
    %c0_i32_0 = arith.constant 0 : i32
    %c0_i32_1 = arith.constant 0 : i32
    return %c0_i32, %c0_i32_0 : i32, i32
  }
  func.func @transform_6(%arg0: i32, %arg1: i32) -> (i32, i32, i32) {
    %c0_i32 = arith.constant 0 : i32
    %c0_i32_0 = arith.constant 0 : i32
    %c0_i32_1 = arith.constant 0 : i32
    return %arg0, %c0_i32, %c0_i32_0 : i32, i32, i32
  }
  func.func @transform_7(%arg0: i32, %arg1: i32) -> (i32, i32, i32) {
    %c0_i32 = arith.constant 0 : i32
    %c0_i32_0 = arith.constant 0 : i32
    %c0_i32_1 = arith.constant 0 : i32
    return %arg0, %c0_i32, %c0_i32_0 : i32, i32, i32
  }
  func.func @transform_8(%arg0: i32, %arg1: i32) -> (i32, i32, i32) {
    %c0_i32 = arith.constant 0 : i32
    %c0_i32_0 = arith.constant 0 : i32
    %c0_i32_1 = arith.constant 0 : i32
    return %arg0, %c0_i32, %c0_i32_0 : i32, i32, i32
  }
  func.func @transform_9(%arg0: i32, %arg1: i32) -> (i32, i32, i32) {
    %c0_i32 = arith.constant 0 : i32
    %c0_i32_0 = arith.constant 0 : i32
    %c0_i32_1 = arith.constant 0 : i32
    return %arg0, %c0_i32, %c0_i32_0 : i32, i32, i32
  }
  func.func @transform_10(%arg0: i32, %arg1: i32) -> (i32, i32, i32) {
    %c0_i32 = arith.constant 0 : i32
    %c0_i32_0 = arith.constant 0 : i32
    %c0_i32_1 = arith.constant 0 : i32
    return %arg0, %c0_i32, %c0_i32_0 : i32, i32, i32
  }
  func.func @transform_11(%arg0: i32, %arg1: i32) -> (i32, i32) {
    %c0_i32 = arith.constant 0 : i32
    %c0_i32_0 = arith.constant 0 : i32
    %c0_i32_1 = arith.constant 0 : i32
    return %c0_i32, %c0_i32_0 : i32, i32
  }
  func.func @transform_12(%arg0: i32, %arg1: i32) -> (i32, i32) {
    %c0_i32 = arith.constant 0 : i32
    %c0_i32_0 = arith.constant 0 : i32
    %c0_i32_1 = arith.constant 0 : i32
    return %c0_i32, %c0_i32_0 : i32, i32
  }
  func.func @transform_13(%arg0: i32, %arg1: i32) -> (i32, i32, i32) {
    %c0_i32 = arith.constant 0 : i32
    %c0_i32_0 = arith.constant 0 : i32
    return %arg0, %arg1, %c0_i32 : i32, i32, i32
  }
}

</mosaic_0001>

<llo_original>
// kernel: cdcor_forward.1
$region0: #{cdcor_forward.1}
  #allocation0 [shape = 'u32[]', space=smem, size = 0x4, offset = 0x4, fixed_abs, tag = 'smem constant byte address 0x4 - core index']
  #allocation1 [shape = 'u32[144,128]{1,0:T(1,128)}', space=vmem, size = 0x12000, scoped, tag = 'internal scratch']
  %s0 = inlined_call_operand.vmem [shape: bf16[2,16,32], index: 0, kind: input, shape index: {}]
  %s1 = inlined_call_operand.vmem [shape: bf16[2,16,32], index: 1, kind: input, shape index: {}]
  %s2 = inlined_call_operand.vmem [shape: bf16[2,32,128], index: 2, kind: input, shape index: {}]
  %s3 = inlined_call_operand.vmem [shape: f32[2,1,128], index: 3, kind: input, shape index: {}]
  %s4 = inlined_call_operand.vmem [shape: bf16[32,128], index: 4, kind: input, shape index: {}]
  %s5 = inlined_call_operand.vmem [shape: f32[1,16], index: 5, kind: input, shape index: {}]
  %s6 = inlined_call_operand.vmem [shape: bf16[2,32,32], index: 6, kind: input, shape index: {}]
  %s7 = inlined_call_operand.vmem [shape: bf16[2,32,32], index: 7, kind: input, shape index: {}]
  %s8 = inlined_call_operand.vmem [shape: f32[2,1,32], index: 8, kind: input, shape index: {}]
  %s9 = inlined_call_operand.vmem [shape: bf16[2,32,16], index: 9, kind: input, shape index: {}]
  %s10 = inlined_call_operand.vmem [shape: f32[2,1,16], index: 10, kind: input, shape index: {}]
  %s11 = inlined_call_operand.vmem [shape: bf16[16,16], index: 11, kind: input, shape index: {}]
  %s12 = inlined_call_operand.vmem [shape: f32[1,16], index: 12, kind: input, shape index: {}]
  %s13 = inlined_call_operand.vmem [shape: f32[2,16,128], index: 13, kind: output, shape index: {}]
  %s14 = sld [smem:[#allocation0]]
  $region85: #{cdcor_forward.1} parent=0
    _
  %s16 = ssub.s32 1, %s14
  %s17 = scalar_select 0, %s16, %s14
  loop: start=0, step=1, limit=4
  $region2: #{cdcor_forward.1} parent=0 // loop_pre_header
    _
  $region3: #{cdcor_forward.1} parent=0 // loop_header
    %s19 = sphi 0, %s23
    %p20 = scmp.ge.s32.totalorder %s19, 4
    %s26 = sphi 0, %s38
    %s27 = sphi 0, %s34
    %s28 = sphi 0, %s26
    %s29 = sphi 0, %s27
    %s30 = sphi 0, %s28
    %s31 = sphi 0, %s29
    %s43 = sphi 0, %s45
    %s46 = sphi 0, %s43
    %s47 = sphi 0, %s46
    %s63 = sphi 0, %s47
    %s71 = sphi 0, %s73
    %s74 = sphi 0, %s71
    %s75 = sphi 0, %s74
    %s91 = sphi 0, %s75
    %s97 = sphi 0, %s99
    %s100 = sphi 0, %s97
    %s101 = sphi 0, %s100
    %s117 = sphi 0, %s101
    %s123 = sphi 0, %s125
    %s126 = sphi 0, %s123
    %s127 = sphi 0, %s126
    %s143 = sphi 0, %s127
    %s147 = sphi 0, %s147
    %s149 = sphi 0, %s147
    %s150 = sphi 0, %s149
    %s164 = sphi 0, %s150
    %s168 = sphi 0, %s168
    %s170 = sphi 0, %s168
    %s171 = sphi 0, %s170
    %s185 = sphi 0, %s171
    %s191 = sphi 0, %s193
    %s194 = sphi 0, %s191
    %s195 = sphi 0, %s194
    %s211 = sphi 0, %s195
    %s217 = sphi 0, %s219
    %s220 = sphi 0, %s217
    %s221 = sphi 0, %s220
    %s237 = sphi 0, %s221
    %s243 = sphi 0, %s245
    %s246 = sphi 0, %s243
    %s247 = sphi 0, %s246
    %s263 = sphi 0, %s247
    %s269 = sphi 0, %s271
    %s272 = sphi 0, %s269
    %s273 = sphi 0, %s272
    %s289 = sphi 0, %s273
    %s295 = sphi 0, %s297
    %s298 = sphi 0, %s295
    %s299 = sphi 0, %s298
    %s315 = sphi 0, %s299
    %s319 = sphi 0, %s319
    %s321 = sphi 0, %s319
    %s322 = sphi 0, %s321
    %s336 = sphi 0, %s322
    %s340 = sphi 0, %s340
    %s342 = sphi 0, %s340
    %s343 = sphi 0, %s342
    %s357 = sphi 0, %s343
    %s365 = sphi 0, %s367
    %s368 = sphi 0, %s365
    %s369 = sphi 0, %s368
    %s385 = sphi 0, %s369
  $region4: #{cdcor_forward.1} parent=0 // loop_header_branch
    %22 = sbr.rel (%p20) target = $region8
  $region5: #{cdcor_forward.1} parent=0 // loop_body
    %s24 = ssub.s32 %s19, 1
    %s25 = ssub.s32 %s19, 2
    %s32 = sadd.s32 1, %s27
    %p33 = scmp.ge.s32.totalorder %s32, 1
    %s34 = scalar_select %p33, 0, %s32
    %s35 = sadd.s32 1, %s26
    %s36 = scalar_select %p33, %s35, %s26
    %p37 = scmp.ge.s32.totalorder %s36, 2
    %s38 = scalar_select %p37, 0, %s36
    %s39 = ssub.s32 %s26, %s38
    %s40 = ssub.s32 %s27, %s34
    %s41 = sor.u32 %s39, %s40
    %p42 = scmp.eq.s32.totalorder %s41, 0
    %s44 = sadd.s32 %s43, 1
    %s45 = scalar_select %p42, %s43, %s44
    %p48 = pneg %p42
    %p49 = scmp.eq.s32.totalorder %s19, 1
    %p50 = por %p48, %p49
    %p51 = scmp.ne.s32.totalorder %s43, %s46
    %p52 = scmp.eq.s32.totalorder %s19, 0
    %p53 = por %p51, %p52
    %p54 = scmp.ne.s32.totalorder %s43, %s46
    %p55 = scmp.eq.s32.totalorder %s24, 1
    %p56 = por %p54, %p55
    %p57 = scmp.ne.s32.totalorder %s46, %s47
    %p58 = scmp.eq.s32.totalorder %s24, 0
    %p59 = por %p57, %p58
    %p60 = scmp.ne.s32.totalorder %s46, %s47
    %p61 = scmp.eq.s32.totalorder %s25, 1
    %p62 = por %p60, %p61
    %p64 = scmp.ne.s32.totalorder %s47, %s63
    %p65 = scmp.eq.s32.totalorder %s25, 0
    %p66 = por %p64, %p65
    %s67 = ssub.s32 %s26, %s38
    %s68 = ssub.s32 %s27, %s34
    %s69 = sor.u32 %s67, %s68
    %p70 = scmp.eq.s32.totalorder %s69, 0
    %s72 = sadd.s32 %s71, 1
    %s73 = scalar_select %p70, %s71, %s72
    %p76 = pneg %p70
    %p77 = scmp.eq.s32.totalorder %s19, 1
    %p78 = por %p76, %p77
    %p79 = scmp.ne.s32.totalorder %s71, %s74
    %p80 = scmp.eq.s32.totalorder %s19, 0
    %p81 = por %p79, %p80
    %p82 = scmp.ne.s32.totalorder %s71, %s74
    %p83 = scmp.eq.s32.totalorder %s24, 1
    %p84 = por %p82, %p83
    %p85 = scmp.ne.s32.totalorder %s74, %s75
    %p86 = scmp.eq.s32.totalorder %s24, 0
    %p87 = por %p85, %p86
    %p88 = scmp.ne.s32.totalorder %s74, %s75
    %p89 = scmp.eq.s32.totalorder %s25, 1
    %p90 = por %p88, %p89
    %p92 = scmp.ne.s32.totalorder %s75, %s91
    %p93 = scmp.eq.s32.totalorder %s25, 0
    %p94 = por %p92, %p93
    %s95 = ssub.s32 %s26, %s38
    %p96 = scmp.eq.s32.totalorder %s95, 0
    %s98 = sadd.s32 %s97, 1
    %s99 = scalar_select %p96, %s97, %s98
    %p102 = pneg %p96
    %p103 = scmp.eq.s32.totalorder %s19, 1
    %p104 = por %p102, %p103
    %p105 = scmp.ne.s32.totalorder %s97, %s100
    %p106 = scmp.eq.s32.totalorder %s19, 0
    %p107 = por %p105, %p106
    %p108 = scmp.ne.s32.totalorder %s97, %s100
    %p109 = scmp.eq.s32.totalorder %s24, 1
    %p110 = por %p108, %p109
    %p111 = scmp.ne.s32.totalorder %s100, %s101
    %p112 = scmp.eq.s32.totalorder %s24, 0
    %p113 = por %p111, %p112
    %p114 = scmp.ne.s32.totalorder %s100, %s101
    %p115 = scmp.eq.s32.totalorder %s25, 1
    %p116 = por %p114, %p115
    %p118 = scmp.ne.s32.totalorder %s101, %s117
    %p119 = scmp.eq.s32.totalorder %s25, 0
    %p120 = por %p118, %p119
    %s121 = ssub.s32 %s26, %s38
    %p122 = scmp.eq.s32.totalorder %s121, 0
    %s124 = sadd.s32 %s123, 1
    %s125 = scalar_select %p122, %s123, %s124
    %p128 = pneg %p122
    %p129 = scmp.eq.s32.totalorder %s19, 1
    %p130 = por %p128, %p129
    %p131 = scmp.ne.s32.totalorder %s123, %s126
    %p132 = scmp.eq.s32.totalorder %s19, 0
    %p133 = por %p131, %p132
    %p134 = scmp.ne.s32.totalorder %s123, %s126
    %p135 = scmp.eq.s32.totalorder %s24, 1
    %p136 = por %p134, %p135
    %p137 = scmp.ne.s32.totalorder %s126, %s127
    %p138 = scmp.eq.s32.totalorder %s24, 0
    %p139 = por %p137, %p138
    %p140 = scmp.ne.s32.totalorder %s126, %s127
    %p141 = scmp.eq.s32.totalorder %s25, 1
    %p142 = por %p140, %p141
    %p144 = scmp.ne.s32.totalorder %s127, %s143
    %p145 = scmp.eq.s32.totalorder %s25, 0
    %p146 = por %p144, %p145
    %s148 = sadd.s32 %s147, 1
    %p151 = scmp.eq.s32.totalorder %s19, 1
    %p152 = scmp.ne.s32.totalorder %s147, %s149
    %p153 = scmp.eq.s32.totalorder %s19, 0
    %p154 = por %p152, %p153
    %p155 = scmp.ne.s32.totalorder %s147, %s149
    %p156 = scmp.eq.s32.totalorder %s24, 1
    %p157 = por %p155, %p156
    %p158 = scmp.ne.s32.totalorder %s149, %s150
    %p159 = scmp.eq.s32.totalorder %s24, 0
    %p160 = por %p158, %p159
    %p161 = scmp.ne.s32.totalorder %s149, %s150
    %p162 = scmp.eq.s32.totalorder %s25, 1
    %p163 = por %p161, %p162
    %p165 = scmp.ne.s32.totalorder %s150, %s164
    %p166 = scmp.eq.s32.totalorder %s25, 0
    %p167 = por %p165, %p166
    %s169 = sadd.s32 %s168, 1
    %p172 = scmp.eq.s32.totalorder %s19, 1
    %p173 = scmp.ne.s32.totalorder %s168, %s170
    %p174 = scmp.eq.s32.totalorder %s19, 0
    %p175 = por %p173, %p174
    %p176 = scmp.ne.s32.totalorder %s168, %s170
    %p177 = scmp.eq.s32.totalorder %s24, 1
    %p178 = por %p176, %p177
    %p179 = scmp.ne.s32.totalorder %s170, %s171
    %p180 = scmp.eq.s32.totalorder %s24, 0
    %p181 = por %p179, %p180
    %p182 = scmp.ne.s32.totalorder %s170, %s171
    %p183 = scmp.eq.s32.totalorder %s25, 1
    %p184 = por %p182, %p183
    %p186 = scmp.ne.s32.totalorder %s171, %s185
    %p187 = scmp.eq.s32.totalorder %s25, 0
    %p188 = por %p186, %p187
    %s189 = ssub.s32 %s26, %s38
    %p190 = scmp.eq.s32.totalorder %s189, 0
    %s192 = sadd.s32 %s191, 1
    %s193 = scalar_select %p190, %s191, %s192
    %p196 = pneg %p190
    %p197 = scmp.eq.s32.totalorder %s19, 1
    %p198 = por %p196, %p197
    %p199 = scmp.ne.s32.totalorder %s191, %s194
    %p200 = scmp.eq.s32.totalorder %s19, 0
    %p201 = por %p199, %p200
    %p202 = scmp.ne.s32.totalorder %s191, %s194
    %p203 = scmp.eq.s32.totalorder %s24, 1
    %p204 = por %p202, %p203
    %p205 = scmp.ne.s32.totalorder %s194, %s195
    %p206 = scmp.eq.s32.totalorder %s24, 0
    %p207 = por %p205, %p206
    %p208 = scmp.ne.s32.totalorder %s194, %s195
    %p209 = scmp.eq.s32.totalorder %s25, 1
    %p210 = por %p208, %p209
    %p212 = scmp.ne.s32.totalorder %s195, %s211
    %p213 = scmp.eq.s32.totalorder %s25, 0
    %p214 = por %p212, %p213
    %s215 = ssub.s32 %s26, %s38
    %p216 = scmp.eq.s32.totalorder %s215, 0
    %s218 = sadd.s32 %s217, 1
    %s219 = scalar_select %p216, %s217, %s218
    %p222 = pneg %p216
    %p223 = scmp.eq.s32.totalorder %s19, 1
    %p224 = por %p222, %p223
    %p225 = scmp.ne.s32.totalorder %s217, %s220
    %p226 = scmp.eq.s32.totalorder %s19, 0
    %p227 = por %p225, %p226
    %p228 = scmp.ne.s32.totalorder %s217, %s220
    %p229 = scmp.eq.s32.totalorder %s24, 1
    %p230 = por %p228, %p229
    %p231 = scmp.ne.s32.totalorder %s220, %s221
    %p232 = scmp.eq.s32.totalorder %s24, 0
    %p233 = por %p231, %p232
    %p234 = scmp.ne.s32.totalorder %s220, %s221
    %p235 = scmp.eq.s32.totalorder %s25, 1
    %p236 = por %p234, %p235
    %p238 = scmp.ne.s32.totalorder %s221, %s237
    %p239 = scmp.eq.s32.totalorder %s25, 0
    %p240 = por %p238, %p239
    %s241 = ssub.s32 %s26, %s38
    %p242 = scmp.eq.s32.totalorder %s241, 0
    %s244 = sadd.s32 %s243, 1
    %s245 = scalar_select %p242, %s243, %s244
    %p248 = pneg %p242
    %p249 = scmp.eq.s32.totalorder %s19, 1
    %p250 = por %p248, %p249
    %p251 = scmp.ne.s32.totalorder %s243, %s246
    %p252 = scmp.eq.s32.totalorder %s19, 0
    %p253 = por %p251, %p252
    %p254 = scmp.ne.s32.totalorder %s243, %s246
    %p255 = scmp.eq.s32.totalorder %s24, 1
    %p256 = por %p254, %p255
    %p257 = scmp.ne.s32.totalorder %s246, %s247
    %p258 = scmp.eq.s32.totalorder %s24, 0
    %p259 = por %p257, %p258
    %p260 = scmp.ne.s32.totalorder %s246, %s247
    %p261 = scmp.eq.s32.totalorder %s25, 1
    %p262 = por %p260, %p261
    %p264 = scmp.ne.s32.totalorder %s247, %s263
    %p265 = scmp.eq.s32.totalorder %s25, 0
    %p266 = por %p264, %p265
    %s267 = ssub.s32 %s26, %s38
    %p268 = scmp.eq.s32.totalorder %s267, 0
    %s270 = sadd.s32 %s269, 1
    %s271 = scalar_select %p268, %s269, %s270
    %p274 = pneg %p268
    %p275 = scmp.eq.s32.totalorder %s19, 1
    %p276 = por %p274, %p275
    %p277 = scmp.ne.s32.totalorder %s269, %s272
    %p278 = scmp.eq.s32.totalorder %s19, 0
    %p279 = por %p277, %p278
    %p280 = scmp.ne.s32.totalorder %s269, %s272
    %p281 = scmp.eq.s32.totalorder %s24, 1
    %p282 = por %p280, %p281
    %p283 = scmp.ne.s32.totalorder %s272, %s273
    %p284 = scmp.eq.s32.totalorder %s24, 0
    %p285 = por %p283, %p284
    %p286 = scmp.ne.s32.totalorder %s272, %s273
    %p287 = scmp.eq.s32.totalorder %s25, 1
    %p288 = por %p286, %p287
    %p290 = scmp.ne.s32.totalorder %s273, %s289
    %p291 = scmp.eq.s32.totalorder %s25, 0
    %p292 = por %p290, %p291
    %s293 = ssub.s32 %s26, %s38
    %p294 = scmp.eq.s32.totalorder %s293, 0
    %s296 = sadd.s32 %s295, 1
    %s297 = scalar_select %p294, %s295, %s296
    %p300 = pneg %p294
    %p301 = scmp.eq.s32.totalorder %s19, 1
    %p302 = por %p300, %p301
    %p303 = scmp.ne.s32.totalorder %s295, %s298
    %p304 = scmp.eq.s32.totalorder %s19, 0
    %p305 = por %p303, %p304
    %p306 = scmp.ne.s32.totalorder %s295, %s298
    %p307 = scmp.eq.s32.totalorder %s24, 1
    %p308 = por %p306, %p307
    %p309 = scmp.ne.s32.totalorder %s298, %s299
    %p310 = scmp.eq.s32.totalorder %s24, 0
    %p311 = por %p309, %p310
    %p312 = scmp.ne.s32.totalorder %s298, %s299
    %p313 = scmp.eq.s32.totalorder %s25, 1
    %p314 = por %p312, %p313
    %p316 = scmp.ne.s32.totalorder %s299, %s315
    %p317 = scmp.eq.s32.totalorder %s25, 0
    %p318 = por %p316, %p317
    %s320 = sadd.s32 %s319, 1
    %p323 = scmp.eq.s32.totalorder %s19, 1
    %p324 = scmp.ne.s32.totalorder %s319, %s321
    %p325 = scmp.eq.s32.totalorder %s19, 0
    %p326 = por %p324, %p325
    %p327 = scmp.ne.s32.totalorder %s319, %s321
    %p328 = scmp.eq.s32.totalorder %s24, 1
    %p329 = por %p327, %p328
    %p330 = scmp.ne.s32.totalorder %s321, %s322
    %p331 = scmp.eq.s32.totalorder %s24, 0
    %p332 = por %p330, %p331
    %p333 = scmp.ne.s32.totalorder %s321, %s322
    %p334 = scmp.eq.s32.totalorder %s25, 1
    %p335 = por %p333, %p334
    %p337 = scmp.ne.s32.totalorder %s322, %s336
    %p338 = scmp.eq.s32.totalorder %s25, 0
    %p339 = por %p337, %p338
    %s341 = sadd.s32 %s340, 1
    %p344 = scmp.eq.s32.totalorder %s19, 1
    %p345 = scmp.ne.s32.totalorder %s340, %s342
    %p346 = scmp.eq.s32.totalorder %s19, 0
    %p347 = por %p345, %p346
    %p348 = scmp.ne.s32.totalorder %s340, %s342
    %p349 = scmp.eq.s32.totalorder %s24, 1
    %p350 = por %p348, %p349
    %p351 = scmp.ne.s32.totalorder %s342, %s343
    %p352 = scmp.eq.s32.totalorder %s24, 0
    %p353 = por %p351, %p352
    %p354 = scmp.ne.s32.totalorder %s342, %s343
    %p355 = scmp.eq.s32.totalorder %s25, 1
    %p356 = por %p354, %p355
    %p358 = scmp.ne.s32.totalorder %s343, %s357
    %p359 = scmp.eq.s32.totalorder %s25, 0
    %p360 = por %p358, %p359
    %s361 = ssub.s32 %s26, %s38
    %s362 = ssub.s32 %s27, %s34
    %s363 = sor.u32 %s361, %s362
    %p364 = scmp.eq.s32.totalorder %s363, 0
    %s366 = sadd.s32 %s365, 1
    %s367 = scalar_select %p364, %s365, %s366
    %p370 = pneg %p364
    %p371 = scmp.eq.s32.totalorder %s19, 1
    %p372 = por %p370, %p371
    %p373 = scmp.ne.s32.totalorder %s365, %s368
    %p374 = scmp.eq.s32.totalorder %s19, 0
    %p375 = por %p373, %p374
    %p376 = scmp.ne.s32.totalorder %s365, %s368
    %p377 = scmp.eq.s32.totalorder %s24, 1
    %p378 = por %p376, %p377
    %p379 = scmp.ne.s32.totalorder %s368, %s369
    %p380 = scmp.eq.s32.totalorder %s24, 0
    %p381 = por %p379, %p380
    %p382 = scmp.ne.s32.totalorder %s368, %s369
    %p383 = scmp.eq.s32.totalorder %s25, 1
    %p384 = por %p382, %p383
    %p386 = scmp.ne.s32.totalorder %s369, %s385
    %p387 = scmp.eq.s32.totalorder %s25, 0
    %p388 = por %p386, %p387
    %p389 = scmp.le.s32.totalorder 1, %s19
    %p390 = scmp.lt.s32.totalorder %s19, 3
    %p391 = pnand %p389, %p390
    %p392 = pneg %p391
    // Predicated region
    $region9: #{cdcor_forward.1} parent=5 // pred_check
      _
    $region10: #{cdcor_forward.1} parent=5 // pred_check_branch
      %394 = sbr.rel (%p391) target = $region12
    $region11: #{cdcor_forward.1} parent=5 // pred_region
      %s395 = ssub.s32 %s19, 1
      // Predicated region
      $region13: #{cdcor_forward.1} parent=11 // pred_check
        %p396 = pneg %p160
      $region14: #{cdcor_forward.1} parent=11 // pred_check_branch
        %398 = sbr.rel (%p396) target = $region16
      $region15: #{cdcor_forward.1} parent=11 // pred_region
        _
      $region16: #{cdcor_forward.1} parent=11 // pred_fallthru
        _
      // Predicated region
      $region17: #{cdcor_forward.1} parent=11 // pred_check
        %p399 = pneg %p181
      $region18: #{cdcor_forward.1} parent=11 // pred_check_branch
        %401 = sbr.rel (%p399) target = $region20
      $region19: #{cdcor_forward.1} parent=11 // pred_region
        _
      $region20: #{cdcor_forward.1} parent=11 // pred_fallthru
        _
      // Predicated region
      $region21: #{cdcor_forward.1} parent=11 // pred_check
        %p402 = pneg %p332
      $region22: #{cdcor_forward.1} parent=11 // pred_check_branch
        %404 = sbr.rel (%p402) target = $region24
      $region23: #{cdcor_forward.1} parent=11 // pred_region
        _
      $region24: #{cdcor_forward.1} parent=11 // pred_fallthru
        _
      // Predicated region
      $region25: #{cdcor_forward.1} parent=11 // pred_check
        %p405 = pneg %p353
      $region26: #{cdcor_forward.1} parent=11 // pred_check_branch
        %407 = sbr.rel (%p405) target = $region28
      $region27: #{cdcor_forward.1} parent=11 // pred_region
        _
      $region28: #{cdcor_forward.1} parent=11 // pred_fallthru
        _
    $region12: #{cdcor_forward.1} parent=5 // pred_fallthru
      _
    %p408 = scmp.lt.s32.totalorder %s19, 2
    // Predicated region
    $region29: #{cdcor_forward.1} parent=5 // pred_check
      %p409 = pneg %p408
    $region30: #{cdcor_forward.1} parent=5 // pred_check_branch
      %411 = sbr.rel (%p409) target = $region32
    $region31: #{cdcor_forward.1} parent=5 // pred_region
      // Predicated region
      $region33: #{cdcor_forward.1} parent=31 // pred_check
        %p412 = pneg %p53
      $region34: #{cdcor_forward.1} parent=31 // pred_check_branch
        %414 = sbr.rel (%p412) target = $region36
      $region35: #{cdcor_forward.1} parent=31 // pred_region
        %s415 = smul.u32 2, %s27
        %p416 = scmp.lt.s32.totalorder %s26, 1
        %s417 = scalar_select %p416, %s26, 1
        %p418 = scmp.lt.s32.totalorder %s415, 1
        %s419 = scalar_select %p418, %s415, 1
        %s420 = smul.addr %s417, 2
        %s421 = sadd.s32 %s419, %s420
        %s422 = smul.addr %s421, 4
        %s423 = scalar_lea.vmem %s0, %s422
        %s424 = smul.u32 2, %s27
      $region36: #{cdcor_forward.1} parent=31 // pred_fallthru
        _
      // Predicated region
      $region37: #{cdcor_forward.1} parent=31 // pred_check
        %p425 = pneg %p81
      $region38: #{cdcor_forward.1} parent=31 // pred_check_branch
        %427 = sbr.rel (%p425) target = $region40
      $region39: #{cdcor_forward.1} parent=31 // pred_region
        %s428 = smul.u32 2, %s27
        %p429 = scmp.lt.s32.totalorder %s26, 1
        %s430 = scalar_select %p429, %s26, 1
        %p431 = scmp.lt.s32.totalorder %s428, 1
        %s432 = scalar_select %p431, %s428, 1
        %s433 = smul.addr %s430, 2
        %s434 = sadd.s32 %s432, %s433
        %s435 = smul.addr %s434, 4
        %s436 = scalar_lea.vmem %s1, %s435
        %s437 = smul.u32 2, %s27
      $region40: #{cdcor_forward.1} parent=31 // pred_fallthru
        _
      // Predicated region
      $region41: #{cdcor_forward.1} parent=31 // pred_check
        %p438 = pneg %p107
      $region42: #{cdcor_forward.1} parent=31 // pred_check_branch
        %440 = sbr.rel (%p438) target = $region44
      $region43: #{cdcor_forward.1} parent=31 // pred_region
        %p441 = scmp.lt.s32.totalorder %s26, 1
        %s442 = scalar_select %p441, %s26, 1
        %s443 = smul.addr %s442, 4
        %s444 = smul.addr %s443, 4
        %s445 = scalar_lea.vmem %s2, %s444
      $region44: #{cdcor_forward.1} parent=31 // pred_fallthru
        _
      // Predicated region
      $region45: #{cdcor_forward.1} parent=31 // pred_check
        %p446 = pneg %p133
      $region46: #{cdcor_forward.1} parent=31 // pred_check_branch
        %448 = sbr.rel (%p446) target = $region48
      $region47: #{cdcor_forward.1} parent=31 // pred_region
        %p449 = scmp.lt.s32.totalorder %s26, 1
        %s450 = scalar_select %p449, %s26, 1
        %s451 = scalar_lea.vmem %s3, %s450
      $region48: #{cdcor_forward.1} parent=31 // pred_fallthru
        _
      // Predicated region
      $region49: #{cdcor_forward.1} parent=31 // pred_check
        %p452 = pneg %p201
      $region50: #{cdcor_forward.1} parent=31 // pred_check_branch
        %454 = sbr.rel (%p452) target = $region52
      $region51: #{cdcor_forward.1} parent=31 // pred_region
        %p455 = scmp.lt.s32.totalorder %s26, 1
        %s456 = scalar_select %p455, %s26, 1
        %s457 = smul.addr %s456, 4
        %s458 = smul.addr %s457, 4
        %s459 = scalar_lea.vmem %s6, %s458
      $region52: #{cdcor_forward.1} parent=31 // pred_fallthru
        _
      // Predicated region
      $region53: #{cdcor_forward.1} parent=31 // pred_check
        %p460 = pneg %p227
      $region54: #{cdcor_forward.1} parent=31 // pred_check_branch
        %462 = sbr.rel (%p460) target = $region56
      $region55: #{cdcor_forward.1} parent=31 // pred_region
        %p463 = scmp.lt.s32.totalorder %s26, 1
        %s464 = scalar_select %p463, %s26, 1
        %s465 = smul.addr %s464, 4
        %s466 = smul.addr %s465, 4
        %s467 = scalar_lea.vmem %s7, %s466
      $region56: #{cdcor_forward.1} parent=31 // pred_fallthru
        _
      // Predicated region
      $region57: #{cdcor_forward.1} parent=31 // pred_check
        %p468 = pneg %p253
      $region58: #{cdcor_forward.1} parent=31 // pred_check_branch
        %470 = sbr.rel (%p468) target = $region60
      $region59: #{cdcor_forward.1} parent=31 // pred_region
        %p471 = scmp.lt.s32.totalorder %s26, 1
        %s472 = scalar_select %p471, %s26, 1
        %s473 = scalar_lea.vmem %s8, %s472
      $region60: #{cdcor_forward.1} parent=31 // pred_fallthru
        _
      // Predicated region
      $region61: #{cdcor_forward.1} parent=31 // pred_check
        %p474 = pneg %p279
      $region62: #{cdcor_forward.1} parent=31 // pred_check_branch
        %476 = sbr.rel (%p474) target = $region64
      $region63: #{cdcor_forward.1} parent=31 // pred_region
        %p477 = scmp.lt.s32.totalorder %s26, 1
        %s478 = scalar_select %p477, %s26, 1
        %s479 = smul.addr %s478, 4
        %s480 = smul.addr %s479, 4
        %s481 = scalar_lea.vmem %s9, %s480
      $region64: #{cdcor_forward.1} parent=31 // pred_fallthru
        _
      // Predicated region
      $region65: #{cdcor_forward.1} parent=31 // pred_check
        %p482 = pneg %p305
      $region66: #{cdcor_forward.1} parent=31 // pred_check_branch
        %484 = sbr.rel (%p482) target = $region68
      $region67: #{cdcor_forward.1} parent=31 // pred_region
        %p485 = scmp.lt.s32.totalorder %s26, 1
        %s486 = scalar_select %p485, %s26, 1
        %s487 = scalar_lea.vmem %s10, %s486
      $region68: #{cdcor_forward.1} parent=31 // pred_fallthru
        _
    $region32: #{cdcor_forward.1} parent=5 // pred_fallthru
      _
    %p488 = scmp.le.s32.totalorder 1, %s19
    %p489 = scmp.lt.s32.totalorder %s19, 3
    %p490 = pnand %p488, %p489
    %p491 = pneg %p490
    // Predicated region
    $region69: #{cdcor_forward.1} parent=5 // pred_check
      _
    $region70: #{cdcor_forward.1} parent=5 // pred_check_branch
      %493 = sbr.rel (%p490) target = $region72
    $region71: #{cdcor_forward.1} parent=5 // pred_region
      %s494 = ssub.s32 %s19, 1
      %s495 = smul.u32 2, %s29
      %p496 = scmp.lt.s32.totalorder %s28, 1
      %s497 = scalar_select %p496, %s28, 1
      %p498 = scmp.lt.s32.totalorder %s495, 1
      %s499 = scalar_select %p498, %s495, 1
      %s500 = smul.addr %s497, 2
      %s501 = sadd.s32 %s499, %s500
      %s502 = smul.addr %s501, 4
      %s503 = scalar_lea.vmem %s0, %s502
      %p504 = pneg %p59
      %p505 = pneg %p56
      %s506 = smul.u32 2, %s29
      %p507 = scmp.lt.s32.totalorder %s28, 1
      %s508 = scalar_select %p507, %s28, 1
      %p509 = scmp.lt.s32.totalorder %s506, 1
      %s510 = scalar_select %p509, %s506, 1
      %s511 = smul.addr %s508, 2
      %s512 = sadd.s32 %s510, %s511
      %s513 = smul.addr %s512, 4
      %s514 = scalar_lea.vmem %s1, %s513
      %p515 = pneg %p87
      %p516 = pneg %p84
      %p517 = scmp.lt.s32.totalorder %s28, 1
      %s518 = scalar_select %p517, %s28, 1
      %s519 = smul.addr %s518, 4
      %s520 = smul.addr %s519, 4
      %s521 = scalar_lea.vmem %s2, %s520
      %p522 = pneg %p113
      %p523 = pneg %p110
      %p524 = scmp.lt.s32.totalorder %s28, 1
      %s525 = scalar_select %p524, %s28, 1
      %s526 = scalar_lea.vmem %s3, %s525
      %p527 = pneg %p139
      %p528 = pneg %p136
      %p529 = pneg %p160
      %p530 = pneg %p157
      %p531 = pneg %p181
      %p532 = pneg %p178
      %p533 = scmp.lt.s32.totalorder %s28, 1
      %s534 = scalar_select %p533, %s28, 1
      %s535 = smul.addr %s534, 4
      %s536 = smul.addr %s535, 4
      %s537 = scalar_lea.vmem %s6, %s536
      %p538 = pneg %p207
      %p539 = pneg %p204
      %p540 = scmp.lt.s32.totalorder %s28, 1
      %s541 = scalar_select %p540, %s28, 1
      %s542 = smul.addr %s541, 4
      %s543 = smul.addr %s542, 4
      %s544 = scalar_lea.vmem %s7, %s543
      %p545 = pneg %p233
      %p546 = pneg %p230
      %p547 = scmp.lt.s32.totalorder %s28, 1
      %s548 = scalar_select %p547, %s28, 1
      %s549 = scalar_lea.vmem %s8, %s548
      %p550 = pneg %p259
      %p551 = pneg %p256
      %p552 = scmp.lt.s32.totalorder %s28, 1
      %s553 = scalar_select %p552, %s28, 1
      %s554 = smul.addr %s553, 4
      %s555 = smul.addr %s554, 4
      %s556 = scalar_lea.vmem %s9, %s555
      %p557 = pneg %p285
      %p558 = pneg %p282
      %p559 = scmp.lt.s32.totalorder %s28, 1
      %s560 = scalar_select %p559, %s28, 1
      %s561 = scalar_lea.vmem %s10, %s560
      %p562 = pneg %p311
      %p563 = pneg %p308
      %p564 = pneg %p332
      %p565 = pneg %p329
      %p566 = pneg %p353
      %p567 = pneg %p350
      %p568 = pneg %p381
      %p569 = pneg %p378
      %s570 = smul.u32 2, %s29
      %p571 = scmp.lt.s32.totalorder %s28, 1
      %s572 = scalar_select %p571, %s28, 1
      %p573 = scmp.lt.s32.totalorder %s570, 1
      %s574 = scalar_select %p573, %s570, 1
      %s575 = smul.addr %s572, 2
      %s576 = sadd.s32 %s574, %s575
      %s577 = smul.addr %s576, 8
      %s578 = scalar_lea.vmem %s13, %s577
      %s579 = smul.u32 2, %s29
      %p580 = scmp.lt.s32.totalorder %s28, 1
      %s581 = scalar_select %p580, %s28, 1
      %p582 = scmp.lt.s32.totalorder %s579, 1
      %s583 = scalar_select %p582, %s579, 1
      %s584 = smul.addr %s581, 2
      %s585 = sadd.s32 %s583, %s584
      %s586 = smul.addr %s585, 4
      %s587 = scalar_lea.vmem %s0, %s586
      %s588 = smul.u32 2, %s29
      %s589 = smul.u32 2, %s29
      %p590 = scmp.lt.s32.totalorder %s28, 1
      %s591 = scalar_select %p590, %s28, 1
      %p592 = scmp.lt.s32.totalorder %s589, 1
      %s593 = scalar_select %p592, %s589, 1
      %s594 = smul.addr %s591, 2
      %s595 = sadd.s32 %s593, %s594
      %s596 = smul.addr %s595, 4
      %s597 = scalar_lea.vmem %s1, %s596
      %s598 = smul.u32 2, %s29
      %p599 = scmp.lt.s32.totalorder %s28, 1
      %s600 = scalar_select %p599, %s28, 1
      %s601 = smul.addr %s600, 4
      %s602 = smul.addr %s601, 4
      %s603 = scalar_lea.vmem %s2, %s602
      %p604 = scmp.lt.s32.totalorder %s28, 1
      %s605 = scalar_select %p604, %s28, 1
      %s606 = scalar_lea.vmem %s3, %s605
      %p607 = scmp.lt.s32.totalorder %s28, 1
      %s608 = scalar_select %p607, %s28, 1
      %s609 = smul.addr %s608, 4
      %s610 = smul.addr %s609, 4
      %s611 = scalar_lea.vmem %s6, %s610
      %p612 = scmp.lt.s32.totalorder %s28, 1
      %s613 = scalar_select %p612, %s28, 1
      %s614 = smul.addr %s613, 4
      %s615 = smul.addr %s614, 4
      %s616 = scalar_lea.vmem %s7, %s615
      %p617 = scmp.lt.s32.totalorder %s28, 1
      %s618 = scalar_select %p617, %s28, 1
      %s619 = scalar_lea.vmem %s8, %s618
      %p620 = scmp.lt.s32.totalorder %s28, 1
      %s621 = scalar_select %p620, %s28, 1
      %s622 = smul.addr %s621, 4
      %s623 = smul.addr %s622, 4
      %s624 = scalar_lea.vmem %s9, %s623
      %p625 = scmp.lt.s32.totalorder %s28, 1
      %s626 = scalar_select %p625, %s28, 1
      %s627 = scalar_lea.vmem %s10, %s626
      %s628 = smul.u32 2, %s29
      %p629 = scmp.lt.s32.totalorder %s28, 1
      %s630 = scalar_select %p629, %s28, 1
      %p631 = scmp.lt.s32.totalorder %s628, 1
      %s632 = scalar_select %p631, %s628, 1
      %s633 = smul.addr %s630, 2
      %s634 = sadd.s32 %s632, %s633
      %s635 = smul.addr %s634, 8
      %s636 = scalar_lea.vmem %s13, %s635
      %s637 = smul.u32 2, %s29
      %v639 = vld [vmem:[%s587] sm:$0xf]
      %v640 = vld [vmem:[%s587 + $0x4] sm:$0xf]
      %v641 = vld [vmem:[%s603] sm:$0xf]
      %v642 = vld [vmem:[%s603 + $0x4] sm:$0xf]
      %v643 = vld [vmem:[%s603 + $0x8] sm:$0xf]
      %v644 = vld [vmem:[%s603 + $0xc] sm:$0xf]
      %v645 = vld [vmem:[%s606] sm:$0x1]
      %v647 = vlaneseq
      %v648 = vshrl.u32 %v647, 7
      %v649 = vsub.s32 0, %v648
      %v650 = vrot.slane %v645, %v649
      %v654 = vunpack.c.l.b16 %v639
      %v655 = vunpack.c.l.b16 %v640
      %v656 = vpack.c.b16 %v655, %v654
      %v661 = vunpack.c.l.b16 %v641
      %v662 = vunpack.c.l.b16 %v642
      %v663 = vunpack.c.l.b16 %v643
      %v664 = vunpack.c.l.b16 %v644
      %v665 = vpack.c.b16 %v662, %v661
      %v666 = vpack.c.b16 %v664, %v663
      %vm669 = vcmask 261120
      %v671 = vsel %vm669, %v656, 0
      %673 = vmatprep.subr.bf16.mxu0 0
      %674 = vmatpush1.bf16.msra.mxu0 0
      %675 = vmatprep.subr.bf16.mxu0 0
      %676 = vmatpush1.bf16.msra.mxu0 0
      %677 = vmatprep.subr.bf16.mxu0 0
      %678 = vmatpush1.bf16.msra.mxu0 0
      %679 = vmatprep.subr.bf16.mxu0 0
      %680 = vmatpush1.bf16.msra.mxu0 0
      %681 = vmatprep.subr.bf16.mxu0 0
      %682 = vmatpush1.bf16.msra.mxu0 0
      %683 = vmatprep.subr.bf16.mxu0 0
      %684 = vmatpush1.bf16.msra.mxu0 0
      %685 = vmatprep.subr.bf16.mxu0 0
      %686 = vmatpush1.bf16.msra.mxu0 %v666
      %687 = vmatprep.subr.bf16.mxu0 0
      %688 = vmatpush1.bf16.msra.mxu0 %v665
      %689 = vmatprep.subr.bf16.mxu0 0
      %690 = vmatpush2.bf16.msra.mxu0 0
      %691 = vmatprep.subr.bf16.mxu0 0
      %692 = vmatpush2.bf16.msra.mxu0 0
      %693 = vmatprep.subr.bf16.mxu0 0
      %694 = vmatpush2.bf16.msra.mxu0 0
      %695 = vmatprep.subr.bf16.mxu0 0
      %696 = vmatpush2.bf16.msra.mxu0 0
      %697 = vmatprep.subr.bf16.mxu0 0
      %698 = vmatpush2.bf16.msra.mxu0 0
      %699 = vmatprep.subr.bf16.mxu0 0
      %700 = vmatpush2.bf16.msra.mxu0 0
      %701 = vmatprep.subr.bf16.mxu0 0
      %702 = vmatpush2.bf16.msra.mxu0 0
      %703 = vmatprep.subr.bf16.mxu0 0
      %704 = vmatpush2.bf16.msra.mxu0 0
      %705 = vmatprep.mubr.bf16.mxu0 0
      %706 = vmatmul.mubr.bf16.gmra.mxu0 %v671
      %v707 = vpop.f32.mrf.mxu0
      %v708 = vadd.f32 %v650, %v707
      %v709 = vpop.f32.mrf.mxu0
      %v710 = vpop.f32.mrf.mxu0
      %v711 = vadd.f32 %v650, %v710
      %v712 = vpop.f32.mrf.mxu0
      %713 = vdwg.mxu0
      %v714 = vlaneseq
      %v715 = vand.u32 %v714, 127
      %vm716 = vcmp.lt.s32.totalorder %v715, 64
      %v717 = vmax.f32 %v708, 0.0
      %v718 = vmax.f32 %v711, 0.0
      %v719 = vsel %vm716, %v717, %v708
      %v720 = vsel %vm716, %v718, %v711
      %v721 = vpack.c.bf16 %v720, %v719
      %v722 = vld [vmem:[%s4] sm:$0xf]
      %v723 = vld [vmem:[%s4 + $0x4] sm:$0xf]
      %v724 = vld [vmem:[%s4 + $0x8] sm:$0xf]
      %v725 = vld [vmem:[%s4 + $0xc] sm:$0xf]
      %727 = vrot.lane.b32.xlu0 %v721, 96
      %v728 = vpop.permute.xlu0 %727
      %v733 = vunpack.c.l.b16 %v722
      %v734 = vunpack.c.l.b16 %v723
      %v735 = vunpack.c.l.b16 %v724
      %v736 = vunpack.c.l.b16 %v725
      %v737 = vpack.c.b16 %v734, %v733
      %v738 = vpack.c.b16 %v736, %v735
      %v742 = vsel %vm669, %v728, 0
      %744 = vmatprep.subr.bf16.mxu0 0
      %745 = vmatpush1.bf16.msra.mxu0 0
      %746 = vmatprep.subr.bf16.mxu0 0
      %747 = vmatpush1.bf16.msra.mxu0 0
      %748 = vmatprep.subr.bf16.mxu0 0
      %749 = vmatpush1.bf16.msra.mxu0 0
      %750 = vmatprep.subr.bf16.mxu0 0
      %751 = vmatpush1.bf16.msra.mxu0 0
      %752 = vmatprep.subr.bf16.mxu0 0
      %753 = vmatpush1.bf16.msra.mxu0 0
      %754 = vmatprep.subr.bf16.mxu0 0
      %755 = vmatpush1.bf16.msra.mxu0 0
      %756 = vmatprep.subr.bf16.mxu0 0
      %757 = vmatpush1.bf16.msra.mxu0 %v738
      %758 = vmatprep.subr.bf16.mxu0 0
      %759 = vmatpush1.bf16.msra.mxu0 %v737
      %760 = vmatprep.subr.bf16.mxu0 0
      %761 = vmatpush2.bf16.msra.mxu0 0
      %762 = vmatprep.subr.bf16.mxu0 0
      %763 = vmatpush2.bf16.msra.mxu0 0
      %764 = vmatprep.subr.bf16.mxu0 0
      %765 = vmatpush2.bf16.msra.mxu0 0
      %766 = vmatprep.subr.bf16.mxu0 0
      %767 = vmatpush2.bf16.msra.mxu0 0
      %768 = vmatprep.subr.bf16.mxu0 0
      %769 = vmatpush2.bf16.msra.mxu0 0
      %770 = vmatprep.subr.bf16.mxu0 0
      %771 = vmatpush2.bf16.msra.mxu0 0
      %772 = vmatprep.subr.bf16.mxu0 0
      %773 = vmatpush2.bf16.msra.mxu0 0
      %774 = vmatprep.subr.bf16.mxu0 0
      %775 = vmatpush2.bf16.msra.mxu0 0
      %776 = vmatprep.mubr.bf16.mxu0 0
      %777 = vmatmul.mubr.bf16.gmra.mxu0 %v742
      %v778 = vpop.f32.mrf.mxu0
      %v779 = vadd.f32 0.0, %v778
      %v780 = vpop.f32.mrf.mxu0
      %v781 = vpop.f32.mrf.mxu0
      %v782 = vadd.f32 0.0, %v781
      %v783 = vpop.f32.mrf.mxu0
      %784 = vdwg.mxu0
      %787 = vrot.lane.b32.xlu0 %v779, 64
      %v788 = vpop.permute.xlu0 %787
      %789 = vrot.lane.b32.xlu0 %v782, 64
      %v790 = vpop.permute.xlu0 %789
      %v793 = vadd.f32 %v719, %v788
      %v794 = vadd.f32 %v720, %v790
      %v795 = vld [vmem:[%s5] sm:$0x1]
      %v797 = vlaneseq
      %v798 = vshrl.u32 %v797, 7
      %v799 = vsub.s32 0, %v798
      %v800 = vrot.slane %v795, %v799
      %801 = vrot.lane.b32.xlu0 %v800, 64
      %v802 = vpop.permute.xlu0 %801
      %v804 = vadd.f32 %v779, %v802
      %v805 = vadd.f32 %v782, %v802
      %v806 = vxor.u32 %v804, 2147483648
      %v807 = vxor.u32 %v805, 2147483648
      %v808 = vmul.f32 %v806, 1.442695
      %v809 = vpow.pop %v808
      %v810 = vmul.f32 %v807, 1.442695
      %v811 = vpow.pop %v810
      %v812 = vadd.f32 %v809, 1.0
      %v813 = vadd.f32 %v811, 1.0
      %v814 = vrcp.pop %v812
      %v815 = vmul.f32 1.0, %v814
      %v816 = vrcp.pop %v813
      %v817 = vmul.f32 1.0, %v816
      %v818 = vld [vmem:[%s611] sm:$0xf]
      %v819 = vld [vmem:[%s611 + $0x4] sm:$0xf]
      %v820 = vld [vmem:[%s611 + $0x8] sm:$0xf]
      %v821 = vld [vmem:[%s611 + $0xc] sm:$0xf]
      %v822 = vpack.c.bf16 %v794, %v793
      %v823 = vld [vmem:[%s616] sm:$0xf]
      %v824 = vld [vmem:[%s616 + $0x4] sm:$0xf]
      %v825 = vld [vmem:[%s616 + $0x8] sm:$0xf]
      %v826 = vld [vmem:[%s616 + $0xc] sm:$0xf]
      %828 = vrot.lane.b32.xlu0 %v822, 32
      %v829 = vpop.permute.xlu0 %828
      %v834 = vunpack.c.l.b16 %v823
      %v835 = vunpack.c.l.b16 %v824
      %v836 = vunpack.c.l.b16 %v825
      %v837 = vunpack.c.l.b16 %v826
      %v838 = vpack.c.b16 %v835, %v834
      %v839 = vpack.c.b16 %v837, %v836
      %v843 = vsel %vm669, %v829, 0
      %845 = vmatprep.subr.bf16.mxu0 0
      %846 = vmatpush1.bf16.msra.mxu0 0
      %847 = vmatprep.subr.bf16.mxu0 0
      %848 = vmatpush1.bf16.msra.mxu0 0
      %849 = vmatprep.subr.bf16.mxu0 0
      %850 = vmatpush1.bf16.msra.mxu0 0
      %851 = vmatprep.subr.bf16.mxu0 0
      %852 = vmatpush1.bf16.msra.mxu0 0
      %853 = vmatprep.subr.bf16.mxu0 0
      %854 = vmatpush1.bf16.msra.mxu0 0
      %855 = vmatprep.subr.bf16.mxu0 0
      %856 = vmatpush1.bf16.msra.mxu0 0
      %857 = vmatprep.subr.bf16.mxu0 0
      %858 = vmatpush1.bf16.msra.mxu0 %v839
      %859 = vmatprep.subr.bf16.mxu0 0
      %860 = vmatpush1.bf16.msra.mxu0 %v838
      %861 = vmatprep.subr.bf16.mxu0 0
      %862 = vmatpush2.bf16.msra.mxu0 0
      %863 = vmatprep.subr.bf16.mxu0 0
      %864 = vmatpush2.bf16.msra.mxu0 0
      %865 = vmatprep.subr.bf16.mxu0 0
      %866 = vmatpush2.bf16.msra.mxu0 0
      %867 = vmatprep.subr.bf16.mxu0 0
      %868 = vmatpush2.bf16.msra.mxu0 0
      %869 = vmatprep.subr.bf16.mxu0 0
      %870 = vmatpush2.bf16.msra.mxu0 0
      %871 = vmatprep.subr.bf16.mxu0 0
      %872 = vmatpush2.bf16.msra.mxu0 0
      %873 = vmatprep.subr.bf16.mxu0 0
      %874 = vmatpush2.bf16.msra.mxu0 0
      %875 = vmatprep.subr.bf16.mxu0 0
      %876 = vmatpush2.bf16.msra.mxu0 0
      %877 = vmatprep.mubr.bf16.mxu0 0
      %878 = vmatmul.mubr.bf16.gmra.mxu0 %v843
      %v879 = vpop.f32.mrf.mxu0
      %v880 = vadd.f32 0.0, %v879
      %v881 = vpop.f32.mrf.mxu0
      %v882 = vpop.f32.mrf.mxu0
      %v883 = vadd.f32 0.0, %v882
      %v884 = vpop.f32.mrf.mxu0
      %885 = vdwg.mxu0
      %v890 = vunpack.c.l.b16 %v818
      %v891 = vunpack.c.l.b16 %v819
      %v892 = vunpack.c.l.b16 %v820
      %v893 = vunpack.c.l.b16 %v821
      %v894 = vpack.c.b16 %v891, %v890
      %v895 = vpack.c.b16 %v893, %v892
      %v899 = vsel %vm669, %v721, 0
      %901 = vmatprep.subr.bf16.mxu0 0
      %902 = vmatpush1.bf16.msra.mxu0 0
      %903 = vmatprep.subr.bf16.mxu0 0
      %904 = vmatpush1.bf16.msra.mxu0 0
      %905 = vmatprep.subr.bf16.mxu0 0
      %906 = vmatpush1.bf16.msra.mxu0 0
      %907 = vmatprep.subr.bf16.mxu0 0
      %908 = vmatpush1.bf16.msra.mxu0 0
      %909 = vmatprep.subr.bf16.mxu0 0
      %910 = vmatpush1.bf16.msra.mxu0 0
      %911 = vmatprep.subr.bf16.mxu0 0
      %912 = vmatpush1.bf16.msra.mxu0 0
      %913 = vmatprep.subr.bf16.mxu0 0
      %914 = vmatpush1.bf16.msra.mxu0 %v895
      %915 = vmatprep.subr.bf16.mxu0 0
      %916 = vmatpush1.bf16.msra.mxu0 %v894
      %917 = vmatprep.subr.bf16.mxu0 0
      %918 = vmatpush2.bf16.msra.mxu0 0
      %919 = vmatprep.subr.bf16.mxu0 0
      %920 = vmatpush2.bf16.msra.mxu0 0
      %921 = vmatprep.subr.bf16.mxu0 0
      %922 = vmatpush2.bf16.msra.mxu0 0
      %923 = vmatprep.subr.bf16.mxu0 0
      %924 = vmatpush2.bf16.msra.mxu0 0
      %925 = vmatprep.subr.bf16.mxu0 0
      %926 = vmatpush2.bf16.msra.mxu0 0
      %927 = vmatprep.subr.bf16.mxu0 0
      %928 = vmatpush2.bf16.msra.mxu0 0
      %929 = vmatprep.subr.bf16.mxu0 0
      %930 = vmatpush2.bf16.msra.mxu0 0
      %931 = vmatprep.subr.bf16.mxu0 0
      %932 = vmatpush2.bf16.msra.mxu0 0
      %933 = vmatprep.mubr.bf16.mxu0 0
      %934 = vmatmul.mubr.bf16.gmra.mxu0 %v899
      %v935 = vpop.f32.mrf.mxu0
      %v936 = vadd.f32 %v880, %v935
      %v937 = vpop.f32.mrf.mxu0
      %v938 = vpop.f32.mrf.mxu0
      %v939 = vadd.f32 %v883, %v938
      %v940 = vpop.f32.mrf.mxu0
      %941 = vdwg.mxu0
      %v942 = vld [vmem:[%s619] sm:$0x1]
      %v944 = vlaneseq
      %v945 = vshrl.u32 %v944, 7
      %v946 = vsub.s32 0, %v945
      %v947 = vrot.slane %v942, %v946
      %v949 = vadd.f32 %v936, %v947
      %v950 = vadd.f32 %v939, %v947
      %v951 = vpack.c.bf16 %v817, %v815
      %v952 = vld [vmem:[%s11] sm:$0xf]
      %v953 = vld [vmem:[%s11 + $0x4] sm:$0xf]
      %v954 = vld [vmem:[%s12] sm:$0x1]
      %v956 = vlaneseq
      %v957 = vshrl.u32 %v956, 7
      %v958 = vsub.s32 0, %v957
      %v959 = vrot.slane %v954, %v958
      %962 = vrot.lane.b32.xlu0 %v951, 64
      %v963 = vpop.permute.xlu0 %962
      %v966 = vunpack.c.l.b16 %v952
      %v967 = vunpack.c.l.b16 %v953
      %v968 = vpack.c.b16 %v967, %v966
      %vm970 = vcmask 130048
      %v972 = vsel %vm970, %v963, 0
      %974 = vmatprep.subr.bf16.mxu0 0
      %975 = vmatpush1.bf16.msra.mxu0 0
      %976 = vmatprep.subr.bf16.mxu0 0
      %977 = vmatpush1.bf16.msra.mxu0 0
      %978 = vmatprep.subr.bf16.mxu0 0
      %979 = vmatpush1.bf16.msra.mxu0 0
      %980 = vmatprep.subr.bf16.mxu0 0
      %981 = vmatpush1.bf16.msra.mxu0 0
      %982 = vmatprep.subr.bf16.mxu0 0
      %983 = vmatpush1.bf16.msra.mxu0 0
      %984 = vmatprep.subr.bf16.mxu0 0
      %985 = vmatpush1.bf16.msra.mxu0 0
      %986 = vmatprep.subr.bf16.mxu0 0
      %987 = vmatpush1.bf16.msra.mxu0 0
      %988 = vmatprep.subr.bf16.mxu0 0
      %989 = vmatpush1.bf16.msra.mxu0 %v968
      %990 = vmatprep.subr.bf16.mxu0 0
      %991 = vmatpush2.bf16.msra.mxu0 0
      %992 = vmatprep.subr.bf16.mxu0 0
      %993 = vmatpush2.bf16.msra.mxu0 0
      %994 = vmatprep.subr.bf16.mxu0 0
      %995 = vmatpush2.bf16.msra.mxu0 0
      %996 = vmatprep.subr.bf16.mxu0 0
      %997 = vmatpush2.bf16.msra.mxu0 0
      %998 = vmatprep.subr.bf16.mxu0 0
      %999 = vmatpush2.bf16.msra.mxu0 0
      %1000 = vmatprep.subr.bf16.mxu0 0
      %1001 = vmatpush2.bf16.msra.mxu0 0
      %1002 = vmatprep.subr.bf16.mxu0 0
      %1003 = vmatpush2.bf16.msra.mxu0 0
      %1004 = vmatprep.subr.bf16.mxu0 0
      %1005 = vmatpush2.bf16.msra.mxu0 0
      %1006 = vmatprep.mubr.bf16.mxu0 0
      %1007 = vmatmul.mubr.bf16.gmra.mxu0 %v972
      %v1008 = vpop.f32.mrf.mxu0
      %v1009 = vadd.f32 %v959, %v1008
      %v1010 = vpop.f32.mrf.mxu0
      %v1011 = vpop.f32.mrf.mxu0
      %v1012 = vadd.f32 %v959, %v1011
      %v1013 = vpop.f32.mrf.mxu0
      %1014 = vdwg.mxu0
      %v1015 = vld [vmem:[%s597] sm:$0xf]
      %v1016 = vld [vmem:[%s597 + $0x4] sm:$0xf]
      %v1017 = vunpack.c.l.bf16 %v1015
      %v1018 = vunpack.c.l.bf16 %v1016
      %v1019 = vmul.f32 %v949, %v1017
      %v1020 = vmul.f32 %v950, %v1018
      %v1021 = vpack.c.bf16 %v1020, %v1019
      %v1022 = vld [vmem:[%s624] sm:$0xf]
      %v1023 = vld [vmem:[%s624 + $0x4] sm:$0xf]
      %v1024 = vld [vmem:[%s624 + $0x8] sm:$0xf]
      %v1025 = vld [vmem:[%s624 + $0xc] sm:$0xf]
      %v1026 = vld [vmem:[%s627] sm:$0x1]
      %v1028 = vlaneseq
      %v1029 = vshrl.u32 %v1028, 7
      %v1030 = vsub.s32 0, %v1029
      %v1031 = vrot.slane %v1026, %v1030
      %v1037 = vunpack.c.l.b16 %v1022
      %v1038 = vunpack.c.l.b16 %v1023
      %v1039 = vunpack.c.l.b16 %v1024
      %v1040 = vunpack.c.l.b16 %v1025
      %v1041 = vpack.c.b16 %v1038, %v1037
      %v1042 = vpack.c.b16 %v1040, %v1039
      %v1046 = vsel %vm669, %v1021, 0
      %1048 = vmatprep.subr.bf16.mxu0 0
      %1049 = vmatpush1.bf16.msra.mxu0 0
      %1050 = vmatprep.subr.bf16.mxu0 0
      %1051 = vmatpush1.bf16.msra.mxu0 0
      %1052 = vmatprep.subr.bf16.mxu0 0
      %1053 = vmatpush1.bf16.msra.mxu0 0
      %1054 = vmatprep.subr.bf16.mxu0 0
      %1055 = vmatpush1.bf16.msra.mxu0 0
      %1056 = vmatprep.subr.bf16.mxu0 0
      %1057 = vmatpush1.bf16.msra.mxu0 0
      %1058 = vmatprep.subr.bf16.mxu0 0
      %1059 = vmatpush1.bf16.msra.mxu0 0
      %1060 = vmatprep.subr.bf16.mxu0 0
      %1061 = vmatpush1.bf16.msra.mxu0 %v1042
      %1062 = vmatprep.subr.bf16.mxu0 0
      %1063 = vmatpush1.bf16.msra.mxu0 %v1041
      %1064 = vmatprep.subr.bf16.mxu0 0
      %1065 = vmatpush2.bf16.msra.mxu0 0
      %1066 = vmatprep.subr.bf16.mxu0 0
      %1067 = vmatpush2.bf16.msra.mxu0 0
      %1068 = vmatprep.subr.bf16.mxu0 0
      %1069 = vmatpush2.bf16.msra.mxu0 0
      %1070 = vmatprep.subr.bf16.mxu0 0
      %1071 = vmatpush2.bf16.msra.mxu0 0
      %1072 = vmatprep.subr.bf16.mxu0 0
      %1073 = vmatpush2.bf16.msra.mxu0 0
      %1074 = vmatprep.subr.bf16.mxu0 0
      %1075 = vmatpush2.bf16.msra.mxu0 0
      %1076 = vmatprep.subr.bf16.mxu0 0
      %1077 = vmatpush2.bf16.msra.mxu0 0
      %1078 = vmatprep.subr.bf16.mxu0 0
      %1079 = vmatpush2.bf16.msra.mxu0 0
      %1080 = vmatprep.mubr.bf16.mxu0 0
      %1081 = vmatmul.mubr.bf16.gmra.mxu0 %v1046
      %v1082 = vpop.f32.mrf.mxu0
      %v1083 = vadd.f32 %v1031, %v1082
      %v1084 = vpop.f32.mrf.mxu0
      %v1085 = vpop.f32.mrf.mxu0
      %v1086 = vadd.f32 %v1031, %v1085
      %v1087 = vpop.f32.mrf.mxu0
      %1088 = vdwg.mxu0
      %1091 = vrot.lane.b32.xlu0 %v793, 64
      %v1092 = vpop.permute.xlu0 %1091
      %1093 = vrot.lane.b32.xlu0 %v794, 64
      %v1094 = vpop.permute.xlu0 %1093
      %1099 = vrot.lane.b32.xlu0 %v719, 32
      %v1100 = vpop.permute.xlu0 %1099
      %1101 = vrot.lane.b32.xlu0 %v720, 32
      %v1102 = vpop.permute.xlu0 %1101
      %1107 = vrot.lane.b32.xlu0 %v1083, 96
      %v1108 = vpop.permute.xlu0 %1107
      %1109 = vrot.lane.b32.xlu0 %v1086, 96
      %v1110 = vpop.permute.xlu0 %1109
      %1115 = vrot.lane.b32.xlu0 %v1009, 112
      %v1116 = vpop.permute.xlu0 %1115
      %1117 = vrot.lane.b32.xlu0 %v1012, 112
      %v1118 = vpop.permute.xlu0 %1117
      %vm1121 = vcmask 523264
      %v1122 = vsel %vm1121, %v1092, %v1100
      %v1123 = vsel %vm1121, %v1094, %v1102
      %vm1124 = vcmask 785408
      %v1125 = vsel %vm1124, %v1122, %v1108
      %v1126 = vsel %vm1124, %v1123, %v1110
      %vm1127 = vcmask 916480
      %v1128 = vsel %vm1127, %v1125, %v1116
      %v1129 = vsel %vm1127, %v1126, %v1118
      %1130 = vst [vmem:[%s636] sm:$0xff] %v1128
      %1131 = vst [vmem:[%s636 + $0x8] sm:$0xff] %v1129
      %s1132 = smul.u32 2, %s29
      %p1133 = scmp.lt.s32.totalorder %s28, 1
      %s1134 = scalar_select %p1133, %s28, 1
      %p1135 = scmp.lt.s32.totalorder %s1132, 1
      %s1136 = scalar_select %p1135, %s1132, 1
      %s1137 = smul.addr %s1134, 2
      %s1138 = sadd.s32 %s1136, %s1137
      %s1139 = smul.addr %s1138, 8
      %s1140 = scalar_lea.vmem %s13, %s1139
      // Predicated region
      $region73: #{cdcor_forward.1} parent=71 // pred_check
        %p1141 = pneg %p378
      $region74: #{cdcor_forward.1} parent=71 // pred_check_branch
        %1143 = sbr.rel (%p1141) target = $region76
      $region75: #{cdcor_forward.1} parent=71 // pred_region
        %s1144 = smul.u32 2, %s29
      $region76: #{cdcor_forward.1} parent=71 // pred_fallthru
        _
    $region72: #{cdcor_forward.1} parent=5 // pred_fallthru
      _
    %p1145 = scmp.le.s32.totalorder 2, %s19
    // Predicated region
    $region77: #{cdcor_forward.1} parent=5 // pred_check
      %p1146 = pneg %p1145
    $region78: #{cdcor_forward.1} parent=5 // pred_check_branch
      %1148 = sbr.rel (%p1146) target = $region80
    $region79: #{cdcor_forward.1} parent=5 // pred_region
      %s1149 = ssub.s32 %s19, 2
      // Predicated region
      $region81: #{cdcor_forward.1} parent=79 // pred_check
        %p1150 = pneg %p384
      $region82: #{cdcor_forward.1} parent=79 // pred_check_branch
        %1152 = sbr.rel (%p1150) target = $region84
      $region83: #{cdcor_forward.1} parent=79 // pred_region
        %s1153 = smul.u32 2, %s31
        %p1154 = scmp.lt.s32.totalorder %s30, 1
        %s1155 = scalar_select %p1154, %s30, 1
        %p1156 = scmp.lt.s32.totalorder %s1153, 1
        %s1157 = scalar_select %p1156, %s1153, 1
        %s1158 = smul.addr %s1155, 2
        %s1159 = sadd.s32 %s1157, %s1158
        %s1160 = smul.addr %s1159, 8
        %s1161 = scalar_lea.vmem %s13, %s1160
      $region84: #{cdcor_forward.1} parent=79 // pred_fallthru
        _
    $region80: #{cdcor_forward.1} parent=5 // pred_fallthru
      _
  $region6: #{cdcor_forward.1} parent=0 // loop_footer
    %s23 = sadd.s32 1, %s19
  $region7: #{cdcor_forward.1} parent=0 // loop_footer_branch
    %18 = sbr.rel target = $region3
  $region8: #{cdcor_forward.1} parent=0 // loop_exit
    _

</llo_original>
